<compile_context>
chip_gen: v5e
topology: v5e:2x2
jax: 0.10.0
libtpu: 0.0.40
codegen_flags: <defaults>
</compile_context>

<pallas_src>
import functools
import math

import jax
import jax.numpy as jnp
from jax import lax
from jax.experimental import pallas as pl
from jax.experimental.pallas import tpu as pltpu


# ----------------------------------------------------------------------------
# Kernel: the serial multi-layer LSTM recurrence only.
# ----------------------------------------------------------------------------
def _lstm_recurrence_kernel(xp0_ref, h0_ref, c0_ref, wih_ref, whh_ref, b_ref,
                            hout_ref, *, seq_len, num_layers, hidden, unroll):
    H = hidden

    def step(t, carry):
        hs = carry[:num_layers]
        cs = carry[num_layers:]
        new_hs, new_cs = [], []
        layer_in = None
        for l in range(num_layers):                          # static, L small
            if l == 0:
                # Layer-0 input projection (x @ W_ih^T + b) precomputed for all
                # T steps in the wrapper; only h @ W_hh^T stays on the serial
                # path.
                gates = xp0_ref[t] + jnp.dot(
                    hs[0], whh_ref[0], preferred_element_type=jnp.float32)
            else:
                # Two dots instead of concat([x, h]) @ W: no per-step (Bp, 2H)
                # concat buffer / extra vst+vld traffic on the serial path.
                gates = (jnp.dot(layer_in, wih_ref[l],
                                 preferred_element_type=jnp.float32)
                         + jnp.dot(hs[l], whh_ref[l],
                                   preferred_element_type=jnp.float32)
                         + b_ref[l])
            # Gate columns reordered wrapper-side to [i, f, o, g]:
            # sigmoid over 3H columns, tanh over H columns.
            sig = jax.nn.sigmoid(gates[:, :3 * H])
            g_g = jnp.tanh(gates[:, 3 * H:])
            i_g = sig[:, :H]
            f_g = sig[:, H:2 * H]
            o_g = sig[:, 2 * H:3 * H]
            c_new = f_g * cs[l] + i_g * g_g
            h_new = o_g * jnp.tanh(c_new)
            new_hs.append(h_new)
            new_cs.append(c_new)
            layer_in = h_new
        hout_ref[t] = layer_in                               # top-layer h only
        return tuple(new_hs) + tuple(new_cs)

    init = (tuple(h0_ref[l] for l in range(num_layers))
            + tuple(c0_ref[l] for l in range(num_layers)))
    lax.fori_loop(0, seq_len, step, init, unroll=unroll)


# ----------------------------------------------------------------------------
# Wrapper: embedding precompute, gate-column reorder, layer-0 projection,
# batch padding, kernel call, FC + log-softmax/log-sigmoid epilogue.
# ----------------------------------------------------------------------------
def decoder_forward(params, target, h0, c0, *, sos, num_layers, hidden,
                    n_acts, out_size, max_length, param_dtype=jnp.float32):
    del n_acts  # table size only matters for the wrapper-side gather
    B = target.shape[0]
    T = max_length
    H = hidden

    # Teacher-forcing decoder inputs: [SOS, target[:, :T-1]] -> (B, T, 2)
    sos_row = jnp.zeros((B, 1, 2), jnp.float32).at[:, :, 0].set(float(sos))
    inputs = jnp.concatenate([sos_row, target[:, :T - 1, :]], axis=1)

    # CustomDurationEmbeddingConcat (dropout=0/eval): Embedding(input_size,H-1)
    # of the activity index concatenated with the raw duration -> (B, T, H).
    idx = inputs[..., 0].astype(jnp.int32)
    emb = params["emb"][idx]                                      # (B, T, H-1)
    layer0_in = jnp.concatenate([emb, inputs[..., 1:2]], axis=-1)  # (B, T, H)
    x_tm = jnp.transpose(layer0_in, (1, 0, 2))                    # (T, B, H)

    # Pad batch to the f32 sublane count (8).
    Bp = max(8, ((B + 7) // 8) * 8)
    pad = Bp - B
    if pad:
        x_tm = jnp.pad(x_tm, ((0, 0), (0, pad), (0, 0)))
        h0 = jnp.pad(h0, ((0, 0), (0, pad), (0, 0)))
        c0 = jnp.pad(c0, ((0, 0), (0, pad), (0, 0)))

    # Reorder PyTorch LSTM gate order [i, f, g, o] -> [i, f, o, g] so the
    # kernel applies sigmoid to a contiguous 3H slab and tanh to the last H.
    def _reorder(w):                                  # gate axis is axis 1
        i, f, g, o = jnp.split(w, 4, axis=1)
        return jnp.concatenate([i, f, o, g], axis=1)

    w_ih_t = jnp.transpose(_reorder(params["w_ih"]), (0, 2, 1))   # (L, H, 4H)
    w_hh_t = jnp.transpose(_reorder(params["w_hh"]), (0, 2, 1))   # (L, H, 4H)
    bias = _reorder(params["b_ih"] + params["b_hh"]).reshape(
        num_layers, 1, 4 * H)                                     # (L, 1, 4H)

    # Layer-0 input projection for all T steps: one big GEMM off the serial
    # path (teacher forcing => every input is known up front).
    xp0 = (jnp.einsum("tbh,hg->tbg", x_tm, w_ih_t[0],
                      preferred_element_type=jnp.float32)
           + bias[0]).astype(jnp.float32)                         # (T, Bp, 4H)

    # Optional bf16 weights for the in-kernel dots (production sizes); keep
    # h/c state, accumulation and elementwise math in f32.
    w_ih_k = w_ih_t.astype(param_dtype)
    w_hh_k = w_hh_t.astype(param_dtype)

    # Batch-chunk grid: >1 chunk lets v7x shard the recurrence across its two
    # TensorCores (no effect on v5e/v6e).
    n_bchunks = 2 if (Bp >= 16 and Bp % 16 == 0) else 1
    B_BLK = Bp // n_bchunks

    unroll = T if T <= 32 else 4
    kernel = functools.partial(_lstm_recurrence_kernel, seq_len=T,
                               num_layers=num_layers, hidden=H, unroll=unroll)

    def _nbytes(shape, dtype):
        return math.prod(shape) * jnp.dtype(dtype).itemsize

    resident = (_nbytes((T, B_BLK, 4 * H), jnp.float32)
                + 2 * _nbytes((num_layers, B_BLK, H), jnp.float32)
                + 2 * _nbytes((num_layers, H, 4 * H), param_dtype)
                + _nbytes((num_layers, 1, 4 * H), jnp.float32)
                + _nbytes((T, B_BLK, H), jnp.float32))
    vmem_limit = int(min(max(2 * resident + (4 << 20), 32 << 20), 64 << 20))

    batch_idx = lambda b: (0, b, 0)
    const_idx = lambda b: (0, 0, 0)

    h_top_tm = pl.pallas_call(
        kernel,
        out_shape=jax.ShapeDtypeStruct((T, Bp, H), jnp.float32),
        grid_spec=pltpu.PrefetchScalarGridSpec(
            num_scalar_prefetch=0,
            grid=(n_bchunks,),
            in_specs=[
                pl.BlockSpec((T, B_BLK, 4 * H), batch_idx),       # xp0
                pl.BlockSpec((num_layers, B_BLK, H), batch_idx),  # h0
                pl.BlockSpec((num_layers, B_BLK, H), batch_idx),  # c0
                pl.BlockSpec((num_layers, H, 4 * H), const_idx),  # W_ih^T
                pl.BlockSpec((num_layers, H, 4 * H), const_idx),  # W_hh^T
                pl.BlockSpec((num_layers, 1, 4 * H), const_idx),  # bias
            ],
            out_specs=pl.BlockSpec((T, B_BLK, H), batch_idx),
        ),
        compiler_params=pltpu.CompilerParams(
            dimension_semantics=("parallel",),
            vmem_limit_bytes=vmem_limit),
    )(xp0, h0, c0, w_ih_k, w_hh_k, bias)

    # Epilogue in XLA: one batched FC GEMM + vectorized log-softmax /
    # log-sigmoid over the whole (B, T, .) tensor (lane-dense, MXU-efficient).
    h_top = jnp.transpose(h_top_tm[:, :B, :], (1, 0, 2))          # (B, T, H)
    pred = h_top @ params["fc_w"].T + params["fc_b"]              # (B, T, O)
    acts = pred[..., :out_size - 1]
    dur = pred[..., out_size - 1:]
    return jnp.concatenate(
        [jax.nn.log_softmax(acts, axis=-1), jax.nn.log_sigmoid(dur)], axis=-1)


# ----------------------------------------------------------------------------
# Pure-JAX reference (mirrors the PyTorch forward, teacher forcing).
# ----------------------------------------------------------------------------
def decoder_ref(params, target, h0, c0, *, sos, num_layers, hidden,
                n_acts, out_size, max_length):
    del n_acts
    B = target.shape[0]
    h, c = h0, c0
    x = jnp.zeros((B, 2), jnp.float32).at[:, 0].set(float(sos))
    outs = []
    for t in range(max_length):
        idx = x[:, 0].astype(jnp.int32)
        e = params["emb"][idx]                                    # (B, H-1)
        layer_in = jnp.concatenate([e, x[:, 1:2]], axis=-1)       # (B, H)
        new_h, new_c = [], []
        for l in range(num_layers):
            gates = (layer_in @ params["w_ih"][l].T + h[l] @ params["w_hh"][l].T
                     + params["b_ih"][l] + params["b_hh"][l])
            i_g = jax.nn.sigmoid(gates[:, :hidden])
            f_g = jax.nn.sigmoid(gates[:, hidden:2 * hidden])
            g_g = jnp.tanh(gates[:, 2 * hidden:3 * hidden])
            o_g = jax.nn.sigmoid(gates[:, 3 * hidden:])
            c_l = f_g * c[l] + i_g * g_g
            h_l = o_g * jnp.tanh(c_l)
            new_h.append(h_l)
            new_c.append(c_l)
            layer_in = h_l
        h, c = jnp.stack(new_h), jnp.stack(new_c)
        outs.append(layer_in @ params["fc_w"].T + params["fc_b"])
        x = target[:, t, :]
    outs = jnp.stack(outs, axis=1)                                # (B, T, O)
    acts, dur = outs[..., :out_size - 1], outs[..., out_size - 1:]
    return jnp.concatenate(
        [jax.nn.log_softmax(acts, axis=-1), jax.nn.log_sigmoid(dur)], axis=-1)


if __name__ == "__main__":
    # Small config: input_size = #activity classes, output_size = classes + 1.
    B, T, H, L = 4, 8, 32, 2
    N_ACTS = 6
    OUT = N_ACTS + 1
    SOS = 0

    key = jax.random.PRNGKey(0)
    ks = jax.random.split(key, 12)
    scale = 1.0 / jnp.sqrt(H)
    params = {
        "emb":  jax.random.normal(ks[0], (N_ACTS, H - 1), jnp.float32) * scale,
        "w_ih": jax.random.normal(ks[1], (L, 4 * H, H), jnp.float32) * scale,
        "w_hh": jax.random.normal(ks[2], (L, 4 * H, H), jnp.float32) * scale,
        "b_ih": jax.random.normal(ks[3], (L, 4 * H), jnp.float32) * scale,
        "b_hh": jax.random.normal(ks[4], (L, 4 * H), jnp.float32) * scale,
        "fc_w": jax.random.normal(ks[5], (OUT, H), jnp.float32) * scale,
        "fc_b": jax.random.normal(ks[6], (OUT,), jnp.float32) * scale,
    }

    # Teacher-forcing target: (B, T, 2) = [activity index (float), duration].
    acts_idx = jax.random.randint(ks[7], (B, T, 1), 0, N_ACTS).astype(jnp.float32)
    durs = jax.random.uniform(ks[8], (B, T, 1), jnp.float32)
    target = jnp.concatenate([acts_idx, durs], axis=-1)

    h0 = jax.random.normal(ks[9], (L, B, H), jnp.float32)
    c0 = jax.random.normal(ks[10], (L, B, H), jnp.float32)

    cfg = dict(sos=SOS, num_layers=L, hidden=H, n_acts=N_ACTS,
               out_size=OUT, max_length=T)

    out = decoder_forward(params, target, h0, c0, **cfg)
    out = jax.block_until_ready(out)

    ref = jax.block_until_ready(decoder_ref(params, target, h0, c0, **cfg))
    assert out.shape == (B, T, OUT), out.shape
    assert jnp.allclose(out, ref, atol=1e-4, rtol=1e-4), \
        float(jnp.max(jnp.abs(out - ref)))
    print("KERNEL_OK")
</pallas_src>

<mosaic_0001>
module attributes {stable_mosaic.version = 11 : i64} {
  func.func @_lstm_recurrence_kernel(%arg0: i32, %arg1: memref<8x8x128xf32, #tpu.memory_space<vmem>>, %arg2: memref<2x8x32xf32, #tpu.memory_space<vmem>>, %arg3: memref<2x8x32xf32, #tpu.memory_space<vmem>>, %arg4: memref<2x32x128xf32, #tpu.memory_space<vmem>>, %arg5: memref<2x32x128xf32, #tpu.memory_space<vmem>>, %arg6: memref<2x1x128xf32, #tpu.memory_space<vmem>>, %arg7: memref<8x8x32xf32, #tpu.memory_space<vmem>>) attributes {dimension_semantics = [#tpu.dimension_semantics<parallel>], iteration_bounds = array<i64: 1>, scalar_prefetch = 0 : i64, scratch_operands = 0 : i64, tpu.core_type = #tpu.core_type<tc>, window_params = [{transform_indices = @transform_0, window_bounds = array<i64: 8, 8, 128>}, {transform_indices = @transform_1, window_bounds = array<i64: 2, 8, 32>}, {transform_indices = @transform_2, window_bounds = array<i64: 2, 8, 32>}, {pipeline_mode = #tpu.pipeline_mode<synchronous>, transform_indices = @transform_3, window_bounds = array<i64: 2, 32, 128>}, {pipeline_mode = #tpu.pipeline_mode<synchronous>, transform_indices = @transform_4, window_bounds = array<i64: 2, 32, 128>}, {pipeline_mode = #tpu.pipeline_mode<synchronous>, transform_indices = @transform_5, window_bounds = array<i64: 2, 1, 128>}, {transform_indices = @transform_6, window_bounds = array<i64: 8, 8, 32>}]} {
    %c0 = arith.constant 0 : index
    %c0_0 = arith.constant 0 : index
    %c0_1 = arith.constant 0 : index
    %0 = vector.load %arg2[%c0, %c0_0, %c0_1] : memref<2x8x32xf32, #tpu.memory_space<vmem>>, vector<1x8x32xf32>
    %1 = vector.shape_cast %0 : vector<1x8x32xf32> to vector<8x32xf32>
    %c1 = arith.constant 1 : index
    %c0_2 = arith.constant 0 : index
    %c0_3 = arith.constant 0 : index
    %2 = vector.load %arg2[%c1, %c0_2, %c0_3] : memref<2x8x32xf32, #tpu.memory_space<vmem>>, vector<1x8x32xf32>
    %3 = vector.shape_cast %2 : vector<1x8x32xf32> to vector<8x32xf32>
    %c0_4 = arith.constant 0 : index
    %c0_5 = arith.constant 0 : index
    %c0_6 = arith.constant 0 : index
    %4 = vector.load %arg3[%c0_4, %c0_5, %c0_6] : memref<2x8x32xf32, #tpu.memory_space<vmem>>, vector<1x8x32xf32>
    %5 = vector.shape_cast %4 : vector<1x8x32xf32> to vector<8x32xf32>
    %c1_7 = arith.constant 1 : index
    %c0_8 = arith.constant 0 : index
    %c0_9 = arith.constant 0 : index
    %6 = vector.load %arg3[%c1_7, %c0_8, %c0_9] : memref<2x8x32xf32, #tpu.memory_space<vmem>>, vector<1x8x32xf32>
    %7 = vector.shape_cast %6 : vector<1x8x32xf32> to vector<8x32xf32>
    %c0_i32 = arith.constant 0 : i32
    %8 = arith.index_cast %c0_i32 : i32 to index
    %c0_10 = arith.constant 0 : index
    %c0_11 = arith.constant 0 : index
    %9 = vector.load %arg1[%8, %c0_10, %c0_11] : memref<8x8x128xf32, #tpu.memory_space<vmem>>, vector<1x8x128xf32>
    %10 = vector.shape_cast %9 : vector<1x8x128xf32> to vector<8x128xf32>
    %c0_12 = arith.constant 0 : index
    %c0_13 = arith.constant 0 : index
    %c0_14 = arith.constant 0 : index
    %11 = vector.load %arg5[%c0_12, %c0_13, %c0_14] : memref<2x32x128xf32, #tpu.memory_space<vmem>>, vector<1x32x128xf32>
    %12 = vector.shape_cast %11 : vector<1x32x128xf32> to vector<32x128xf32>
    %cst = arith.constant dense<0.000000e+00> : vector<8x128xf32>
    %13 = tpu.matmul %1, %12, %cst {dimension_numbers = #tpu.dot_dimension_numbers<[1], [0], [0], [1], [0, 0, 1, 1], [], []>} : vector<8x32xf32>, vector<32x128xf32>, vector<8x128xf32> -> vector<8x128xf32>
    %14 = arith.addf %10, %13 : vector<8x128xf32>
    %15 = vector.extract_strided_slice %14 {offsets = [0, 0], sizes = [8, 96], strides = [1, 1]} : vector<8x128xf32> to vector<8x96xf32>
    %16 = arith.negf %15 : vector<8x96xf32>
    %17 = math.exp %16 : vector<8x96xf32>
    %cst_15 = arith.constant 1.000000e+00 : f32
    %18 = vector.broadcast %cst_15 : f32 to vector<8x96xf32>
    %19 = arith.addf %18, %17 : vector<8x96xf32>
    %20 = arith.divf %18, %19 : vector<8x96xf32>
    %21 = vector.extract_strided_slice %14 {offsets = [0, 96], sizes = [8, 32], strides = [1, 1]} : vector<8x128xf32> to vector<8x32xf32>
    %22 = math.tanh %21 : vector<8x32xf32>
    %23 = vector.extract_strided_slice %20 {offsets = [0, 0], sizes = [8, 32], strides = [1, 1]} : vector<8x96xf32> to vector<8x32xf32>
    %24 = vector.extract_strided_slice %20 {offsets = [0, 32], sizes = [8, 32], strides = [1, 1]} : vector<8x96xf32> to vector<8x32xf32>
    %25 = vector.extract_strided_slice %20 {offsets = [0, 64], sizes = [8, 32], strides = [1, 1]} : vector<8x96xf32> to vector<8x32xf32>
    %26 = arith.mulf %24, %5 : vector<8x32xf32>
    %27 = arith.mulf %23, %22 : vector<8x32xf32>
    %28 = arith.addf %26, %27 : vector<8x32xf32>
    %29 = math.tanh %28 : vector<8x32xf32>
    %30 = arith.mulf %25, %29 : vector<8x32xf32>
    %c1_16 = arith.constant 1 : index
    %c0_17 = arith.constant 0 : index
    %c0_18 = arith.constant 0 : index
    %31 = vector.load %arg4[%c1_16, %c0_17, %c0_18] : memref<2x32x128xf32, #tpu.memory_space<vmem>>, vector<1x32x128xf32>
    %32 = vector.shape_cast %31 : vector<1x32x128xf32> to vector<32x128xf32>
    %cst_19 = arith.constant dense<0.000000e+00> : vector<8x128xf32>
    %33 = tpu.matmul %30, %32, %cst_19 {dimension_numbers = #tpu.dot_dimension_numbers<[1], [0], [0], [1], [0, 0, 1, 1], [], []>} : vector<8x32xf32>, vector<32x128xf32>, vector<8x128xf32> -> vector<8x128xf32>
    %c1_20 = arith.constant 1 : index
    %c0_21 = arith.constant 0 : index
    %c0_22 = arith.constant 0 : index
    %34 = vector.load %arg5[%c1_20, %c0_21, %c0_22] : memref<2x32x128xf32, #tpu.memory_space<vmem>>, vector<1x32x128xf32>
    %35 = vector.shape_cast %34 : vector<1x32x128xf32> to vector<32x128xf32>
    %cst_23 = arith.constant dense<0.000000e+00> : vector<8x128xf32>
    %36 = tpu.matmul %3, %35, %cst_23 {dimension_numbers = #tpu.dot_dimension_numbers<[1], [0], [0], [1], [0, 0, 1, 1], [], []>} : vector<8x32xf32>, vector<32x128xf32>, vector<8x128xf32> -> vector<8x128xf32>
    %37 = arith.addf %33, %36 : vector<8x128xf32>
    %c1_24 = arith.constant 1 : index
    %c0_25 = arith.constant 0 : index
    %c0_26 = arith.constant 0 : index
    %38 = vector.load %arg6[%c1_24, %c0_25, %c0_26] : memref<2x1x128xf32, #tpu.memory_space<vmem>>, vector<1x1x128xf32>
    %39 = vector.shape_cast %38 : vector<1x1x128xf32> to vector<1x128xf32>
    %40 = vector.broadcast %39 : vector<1x128xf32> to vector<8x128xf32>
    %41 = arith.addf %37, %40 : vector<8x128xf32>
    %42 = vector.extract_strided_slice %41 {offsets = [0, 0], sizes = [8, 96], strides = [1, 1]} : vector<8x128xf32> to vector<8x96xf32>
    %43 = arith.negf %42 : vector<8x96xf32>
    %44 = math.exp %43 : vector<8x96xf32>
    %cst_27 = arith.constant 1.000000e+00 : f32
    %45 = vector.broadcast %cst_27 : f32 to vector<8x96xf32>
    %46 = arith.addf %45, %44 : vector<8x96xf32>
    %47 = arith.divf %45, %46 : vector<8x96xf32>
    %48 = vector.extract_strided_slice %41 {offsets = [0, 96], sizes = [8, 32], strides = [1, 1]} : vector<8x128xf32> to vector<8x32xf32>
    %49 = math.tanh %48 : vector<8x32xf32>
    %50 = vector.extract_strided_slice %47 {offsets = [0, 0], sizes = [8, 32], strides = [1, 1]} : vector<8x96xf32> to vector<8x32xf32>
    %51 = vector.extract_strided_slice %47 {offsets = [0, 32], sizes = [8, 32], strides = [1, 1]} : vector<8x96xf32> to vector<8x32xf32>
    %52 = vector.extract_strided_slice %47 {offsets = [0, 64], sizes = [8, 32], strides = [1, 1]} : vector<8x96xf32> to vector<8x32xf32>
    %53 = arith.mulf %51, %7 : vector<8x32xf32>
    %54 = arith.mulf %50, %49 : vector<8x32xf32>
    %55 = arith.addf %53, %54 : vector<8x32xf32>
    %56 = math.tanh %55 : vector<8x32xf32>
    %57 = arith.mulf %52, %56 : vector<8x32xf32>
    %58 = arith.index_cast %c0_i32 : i32 to index
    %c0_28 = arith.constant 0 : index
    %c0_29 = arith.constant 0 : index
    %59 = vector.load %arg7[%58, %c0_28, %c0_29] : memref<8x8x32xf32, #tpu.memory_space<vmem>>, vector<1x8x32xf32>
    %60 = vector.shape_cast %59 : vector<1x8x32xf32> to vector<8x32xf32>
    %61 = vector.shape_cast %57 : vector<8x32xf32> to vector<1x8x32xf32>
    tpu.vector_store %arg7[%58, %c0_28, %c0_29], %61 {strides = array<i32>} : memref<8x8x32xf32, #tpu.memory_space<vmem>>, vector<1x8x32xf32>,
    %c1_i32 = arith.constant 1 : i32
    %62 = arith.index_cast %c1_i32 : i32 to index
    %c0_30 = arith.constant 0 : index
    %c0_31 = arith.constant 0 : index
    %63 = vector.load %arg1[%62, %c0_30, %c0_31] : memref<8x8x128xf32, #tpu.memory_space<vmem>>, vector<1x8x128xf32>
    %64 = vector.shape_cast %63 : vector<1x8x128xf32> to vector<8x128xf32>
    %c0_32 = arith.constant 0 : index
    %c0_33 = arith.constant 0 : index
    %c0_34 = arith.constant 0 : index
    %65 = vector.load %arg5[%c0_32, %c0_33, %c0_34] : memref<2x32x128xf32, #tpu.memory_space<vmem>>, vector<1x32x128xf32>
    %66 = vector.shape_cast %65 : vector<1x32x128xf32> to vector<32x128xf32>
    %cst_35 = arith.constant dense<0.000000e+00> : vector<8x128xf32>
    %67 = tpu.matmul %30, %66, %cst_35 {dimension_numbers = #tpu.dot_dimension_numbers<[1], [0], [0], [1], [0, 0, 1, 1], [], []>} : vector<8x32xf32>, vector<32x128xf32>, vector<8x128xf32> -> vector<8x128xf32>
    %68 = arith.addf %64, %67 : vector<8x128xf32>
    %69 = vector.extract_strided_slice %68 {offsets = [0, 0], sizes = [8, 96], strides = [1, 1]} : vector<8x128xf32> to vector<8x96xf32>
    %70 = arith.negf %69 : vector<8x96xf32>
    %71 = math.exp %70 : vector<8x96xf32>
    %cst_36 = arith.constant 1.000000e+00 : f32
    %72 = vector.broadcast %cst_36 : f32 to vector<8x96xf32>
    %73 = arith.addf %72, %71 : vector<8x96xf32>
    %74 = arith.divf %72, %73 : vector<8x96xf32>
    %75 = vector.extract_strided_slice %68 {offsets = [0, 96], sizes = [8, 32], strides = [1, 1]} : vector<8x128xf32> to vector<8x32xf32>
    %76 = math.tanh %75 : vector<8x32xf32>
    %77 = vector.extract_strided_slice %74 {offsets = [0, 0], sizes = [8, 32], strides = [1, 1]} : vector<8x96xf32> to vector<8x32xf32>
    %78 = vector.extract_strided_slice %74 {offsets = [0, 32], sizes = [8, 32], strides = [1, 1]} : vector<8x96xf32> to vector<8x32xf32>
    %79 = vector.extract_strided_slice %74 {offsets = [0, 64], sizes = [8, 32], strides = [1, 1]} : vector<8x96xf32> to vector<8x32xf32>
    %80 = arith.mulf %78, %28 : vector<8x32xf32>
    %81 = arith.mulf %77, %76 : vector<8x32xf32>
    %82 = arith.addf %80, %81 : vector<8x32xf32>
    %83 = math.tanh %82 : vector<8x32xf32>
    %84 = arith.mulf %79, %83 : vector<8x32xf32>
    %c1_37 = arith.constant 1 : index
    %c0_38 = arith.constant 0 : index
    %c0_39 = arith.constant 0 : index
    %85 = vector.load %arg4[%c1_37, %c0_38, %c0_39] : memref<2x32x128xf32, #tpu.memory_space<vmem>>, vector<1x32x128xf32>
    %86 = vector.shape_cast %85 : vector<1x32x128xf32> to vector<32x128xf32>
    %cst_40 = arith.constant dense<0.000000e+00> : vector<8x128xf32>
    %87 = tpu.matmul %84, %86, %cst_40 {dimension_numbers = #tpu.dot_dimension_numbers<[1], [0], [0], [1], [0, 0, 1, 1], [], []>} : vector<8x32xf32>, vector<32x128xf32>, vector<8x128xf32> -> vector<8x128xf32>
    %c1_41 = arith.constant 1 : index
    %c0_42 = arith.constant 0 : index
    %c0_43 = arith.constant 0 : index
    %88 = vector.load %arg5[%c1_41, %c0_42, %c0_43] : memref<2x32x128xf32, #tpu.memory_space<vmem>>, vector<1x32x128xf32>
    %89 = vector.shape_cast %88 : vector<1x32x128xf32> to vector<32x128xf32>
    %cst_44 = arith.constant dense<0.000000e+00> : vector<8x128xf32>
    %90 = tpu.matmul %57, %89, %cst_44 {dimension_numbers = #tpu.dot_dimension_numbers<[1], [0], [0], [1], [0, 0, 1, 1], [], []>} : vector<8x32xf32>, vector<32x128xf32>, vector<8x128xf32> -> vector<8x128xf32>
    %91 = arith.addf %87, %90 : vector<8x128xf32>
    %c1_45 = arith.constant 1 : index
    %c0_46 = arith.constant 0 : index
    %c0_47 = arith.constant 0 : index
    %92 = vector.load %arg6[%c1_45, %c0_46, %c0_47] : memref<2x1x128xf32, #tpu.memory_space<vmem>>, vector<1x1x128xf32>
    %93 = vector.shape_cast %92 : vector<1x1x128xf32> to vector<1x128xf32>
    %94 = vector.broadcast %93 : vector<1x128xf32> to vector<8x128xf32>
    %95 = arith.addf %91, %94 : vector<8x128xf32>
    %96 = vector.extract_strided_slice %95 {offsets = [0, 0], sizes = [8, 96], strides = [1, 1]} : vector<8x128xf32> to vector<8x96xf32>
    %97 = arith.negf %96 : vector<8x96xf32>
    %98 = math.exp %97 : vector<8x96xf32>
    %cst_48 = arith.constant 1.000000e+00 : f32
    %99 = vector.broadcast %cst_48 : f32 to vector<8x96xf32>
    %100 = arith.addf %99, %98 : vector<8x96xf32>
    %101 = arith.divf %99, %100 : vector<8x96xf32>
    %102 = vector.extract_strided_slice %95 {offsets = [0, 96], sizes = [8, 32], strides = [1, 1]} : vector<8x128xf32> to vector<8x32xf32>
    %103 = math.tanh %102 : vector<8x32xf32>
    %104 = vector.extract_strided_slice %101 {offsets = [0, 0], sizes = [8, 32], strides = [1, 1]} : vector<8x96xf32> to vector<8x32xf32>
    %105 = vector.extract_strided_slice %101 {offsets = [0, 32], sizes = [8, 32], strides = [1, 1]} : vector<8x96xf32> to vector<8x32xf32>
    %106 = vector.extract_strided_slice %101 {offsets = [0, 64], sizes = [8, 32], strides = [1, 1]} : vector<8x96xf32> to vector<8x32xf32>
    %107 = arith.mulf %105, %55 : vector<8x32xf32>
    %108 = arith.mulf %104, %103 : vector<8x32xf32>
    %109 = arith.addf %107, %108 : vector<8x32xf32>
    %110 = math.tanh %109 : vector<8x32xf32>
    %111 = arith.mulf %106, %110 : vector<8x32xf32>
    %112 = arith.index_cast %c1_i32 : i32 to index
    %c0_49 = arith.constant 0 : index
    %c0_50 = arith.constant 0 : index
    %113 = vector.load %arg7[%112, %c0_49, %c0_50] : memref<8x8x32xf32, #tpu.memory_space<vmem>>, vector<1x8x32xf32>
    %114 = vector.shape_cast %113 : vector<1x8x32xf32> to vector<8x32xf32>
    %115 = vector.shape_cast %111 : vector<8x32xf32> to vector<1x8x32xf32>
    tpu.vector_store %arg7[%112, %c0_49, %c0_50], %115 {strides = array<i32>} : memref<8x8x32xf32, #tpu.memory_space<vmem>>, vector<1x8x32xf32>,
    %c2_i32 = arith.constant 2 : i32
    %116 = arith.index_cast %c2_i32 : i32 to index
    %c0_51 = arith.constant 0 : index
    %c0_52 = arith.constant 0 : index
    %117 = vector.load %arg1[%116, %c0_51, %c0_52] : memref<8x8x128xf32, #tpu.memory_space<vmem>>, vector<1x8x128xf32>
    %118 = vector.shape_cast %117 : vector<1x8x128xf32> to vector<8x128xf32>
    %c0_53 = arith.constant 0 : index
    %c0_54 = arith.constant 0 : index
    %c0_55 = arith.constant 0 : index
    %119 = vector.load %arg5[%c0_53, %c0_54, %c0_55] : memref<2x32x128xf32, #tpu.memory_space<vmem>>, vector<1x32x128xf32>
    %120 = vector.shape_cast %119 : vector<1x32x128xf32> to vector<32x128xf32>
    %cst_56 = arith.constant dense<0.000000e+00> : vector<8x128xf32>
    %121 = tpu.matmul %84, %120, %cst_56 {dimension_numbers = #tpu.dot_dimension_numbers<[1], [0], [0], [1], [0, 0, 1, 1], [], []>} : vector<8x32xf32>, vector<32x128xf32>, vector<8x128xf32> -> vector<8x128xf32>
    %122 = arith.addf %118, %121 : vector<8x128xf32>
    %123 = vector.extract_strided_slice %122 {offsets = [0, 0], sizes = [8, 96], strides = [1, 1]} : vector<8x128xf32> to vector<8x96xf32>
    %124 = arith.negf %123 : vector<8x96xf32>
    %125 = math.exp %124 : vector<8x96xf32>
    %cst_57 = arith.constant 1.000000e+00 : f32
    %126 = vector.broadcast %cst_57 : f32 to vector<8x96xf32>
    %127 = arith.addf %126, %125 : vector<8x96xf32>
    %128 = arith.divf %126, %127 : vector<8x96xf32>
    %129 = vector.extract_strided_slice %122 {offsets = [0, 96], sizes = [8, 32], strides = [1, 1]} : vector<8x128xf32> to vector<8x32xf32>
    %130 = math.tanh %129 : vector<8x32xf32>
    %131 = vector.extract_strided_slice %128 {offsets = [0, 0], sizes = [8, 32], strides = [1, 1]} : vector<8x96xf32> to vector<8x32xf32>
    %132 = vector.extract_strided_slice %128 {offsets = [0, 32], sizes = [8, 32], strides = [1, 1]} : vector<8x96xf32> to vector<8x32xf32>
    %133 = vector.extract_strided_slice %128 {offsets = [0, 64], sizes = [8, 32], strides = [1, 1]} : vector<8x96xf32> to vector<8x32xf32>
    %134 = arith.mulf %132, %82 : vector<8x32xf32>
    %135 = arith.mulf %131, %130 : vector<8x32xf32>
    %136 = arith.addf %134, %135 : vector<8x32xf32>
    %137 = math.tanh %136 : vector<8x32xf32>
    %138 = arith.mulf %133, %137 : vector<8x32xf32>
    %c1_58 = arith.constant 1 : index
    %c0_59 = arith.constant 0 : index
    %c0_60 = arith.constant 0 : index
    %139 = vector.load %arg4[%c1_58, %c0_59, %c0_60] : memref<2x32x128xf32, #tpu.memory_space<vmem>>, vector<1x32x128xf32>
    %140 = vector.shape_cast %139 : vector<1x32x128xf32> to vector<32x128xf32>
    %cst_61 = arith.constant dense<0.000000e+00> : vector<8x128xf32>
    %141 = tpu.matmul %138, %140, %cst_61 {dimension_numbers = #tpu.dot_dimension_numbers<[1], [0], [0], [1], [0, 0, 1, 1], [], []>} : vector<8x32xf32>, vector<32x128xf32>, vector<8x128xf32> -> vector<8x128xf32>
    %c1_62 = arith.constant 1 : index
    %c0_63 = arith.constant 0 : index
    %c0_64 = arith.constant 0 : index
    %142 = vector.load %arg5[%c1_62, %c0_63, %c0_64] : memref<2x32x128xf32, #tpu.memory_space<vmem>>, vector<1x32x128xf32>
    %143 = vector.shape_cast %142 : vector<1x32x128xf32> to vector<32x128xf32>
    %cst_65 = arith.constant dense<0.000000e+00> : vector<8x128xf32>
    %144 = tpu.matmul %111, %143, %cst_65 {dimension_numbers = #tpu.dot_dimension_numbers<[1], [0], [0], [1], [0, 0, 1, 1], [], []>} : vector<8x32xf32>, vector<32x128xf32>, vector<8x128xf32> -> vector<8x128xf32>
    %145 = arith.addf %141, %144 : vector<8x128xf32>
    %c1_66 = arith.constant 1 : index
    %c0_67 = arith.constant 0 : index
    %c0_68 = arith.constant 0 : index
    %146 = vector.load %arg6[%c1_66, %c0_67, %c0_68] : memref<2x1x128xf32, #tpu.memory_space<vmem>>, vector<1x1x128xf32>
    %147 = vector.shape_cast %146 : vector<1x1x128xf32> to vector<1x128xf32>
    %148 = vector.broadcast %147 : vector<1x128xf32> to vector<8x128xf32>
    %149 = arith.addf %145, %148 : vector<8x128xf32>
    %150 = vector.extract_strided_slice %149 {offsets = [0, 0], sizes = [8, 96], strides = [1, 1]} : vector<8x128xf32> to vector<8x96xf32>
    %151 = arith.negf %150 : vector<8x96xf32>
    %152 = math.exp %151 : vector<8x96xf32>
    %cst_69 = arith.constant 1.000000e+00 : f32
    %153 = vector.broadcast %cst_69 : f32 to vector<8x96xf32>
    %154 = arith.addf %153, %152 : vector<8x96xf32>
    %155 = arith.divf %153, %154 : vector<8x96xf32>
    %156 = vector.extract_strided_slice %149 {offsets = [0, 96], sizes = [8, 32], strides = [1, 1]} : vector<8x128xf32> to vector<8x32xf32>
    %157 = math.tanh %156 : vector<8x32xf32>
    %158 = vector.extract_strided_slice %155 {offsets = [0, 0], sizes = [8, 32], strides = [1, 1]} : vector<8x96xf32> to vector<8x32xf32>
    %159 = vector.extract_strided_slice %155 {offsets = [0, 32], sizes = [8, 32], strides = [1, 1]} : vector<8x96xf32> to vector<8x32xf32>
    %160 = vector.extract_strided_slice %155 {offsets = [0, 64], sizes = [8, 32], strides = [1, 1]} : vector<8x96xf32> to vector<8x32xf32>
    %161 = arith.mulf %159, %109 : vector<8x32xf32>
    %162 = arith.mulf %158, %157 : vector<8x32xf32>
    %163 = arith.addf %161, %162 : vector<8x32xf32>
    %164 = math.tanh %163 : vector<8x32xf32>
    %165 = arith.mulf %160, %164 : vector<8x32xf32>
    %166 = arith.index_cast %c2_i32 : i32 to index
    %c0_70 = arith.constant 0 : index
    %c0_71 = arith.constant 0 : index
    %167 = vector.load %arg7[%166, %c0_70, %c0_71] : memref<8x8x32xf32, #tpu.memory_space<vmem>>, vector<1x8x32xf32>
    %168 = vector.shape_cast %167 : vector<1x8x32xf32> to vector<8x32xf32>
    %169 = vector.shape_cast %165 : vector<8x32xf32> to vector<1x8x32xf32>
    tpu.vector_store %arg7[%166, %c0_70, %c0_71], %169 {strides = array<i32>} : memref<8x8x32xf32, #tpu.memory_space<vmem>>, vector<1x8x32xf32>,
    %c3_i32 = arith.constant 3 : i32
    %170 = arith.index_cast %c3_i32 : i32 to index
    %c0_72 = arith.constant 0 : index
    %c0_73 = arith.constant 0 : index
    %171 = vector.load %arg1[%170, %c0_72, %c0_73] : memref<8x8x128xf32, #tpu.memory_space<vmem>>, vector<1x8x128xf32>
    %172 = vector.shape_cast %171 : vector<1x8x128xf32> to vector<8x128xf32>
    %c0_74 = arith.constant 0 : index
    %c0_75 = arith.constant 0 : index
    %c0_76 = arith.constant 0 : index
    %173 = vector.load %arg5[%c0_74, %c0_75, %c0_76] : memref<2x32x128xf32, #tpu.memory_space<vmem>>, vector<1x32x128xf32>
    %174 = vector.shape_cast %173 : vector<1x32x128xf32> to vector<32x128xf32>
    %cst_77 = arith.constant dense<0.000000e+00> : vector<8x128xf32>
    %175 = tpu.matmul %138, %174, %cst_77 {dimension_numbers = #tpu.dot_dimension_numbers<[1], [0], [0], [1], [0, 0, 1, 1], [], []>} : vector<8x32xf32>, vector<32x128xf32>, vector<8x128xf32> -> vector<8x128xf32>
    %176 = arith.addf %172, %175 : vector<8x128xf32>
    %177 = vector.extract_strided_slice %176 {offsets = [0, 0], sizes = [8, 96], strides = [1, 1]} : vector<8x128xf32> to vector<8x96xf32>
    %178 = arith.negf %177 : vector<8x96xf32>
    %179 = math.exp %178 : vector<8x96xf32>
    %cst_78 = arith.constant 1.000000e+00 : f32
    %180 = vector.broadcast %cst_78 : f32 to vector<8x96xf32>
    %181 = arith.addf %180, %179 : vector<8x96xf32>
    %182 = arith.divf %180, %181 : vector<8x96xf32>
    %183 = vector.extract_strided_slice %176 {offsets = [0, 96], sizes = [8, 32], strides = [1, 1]} : vector<8x128xf32> to vector<8x32xf32>
    %184 = math.tanh %183 : vector<8x32xf32>
    %185 = vector.extract_strided_slice %182 {offsets = [0, 0], sizes = [8, 32], strides = [1, 1]} : vector<8x96xf32> to vector<8x32xf32>
    %186 = vector.extract_strided_slice %182 {offsets = [0, 32], sizes = [8, 32], strides = [1, 1]} : vector<8x96xf32> to vector<8x32xf32>
    %187 = vector.extract_strided_slice %182 {offsets = [0, 64], sizes = [8, 32], strides = [1, 1]} : vector<8x96xf32> to vector<8x32xf32>
    %188 = arith.mulf %186, %136 : vector<8x32xf32>
    %189 = arith.mulf %185, %184 : vector<8x32xf32>
    %190 = arith.addf %188, %189 : vector<8x32xf32>
    %191 = math.tanh %190 : vector<8x32xf32>
    %192 = arith.mulf %187, %191 : vector<8x32xf32>
    %c1_79 = arith.constant 1 : index
    %c0_80 = arith.constant 0 : index
    %c0_81 = arith.constant 0 : index
    %193 = vector.load %arg4[%c1_79, %c0_80, %c0_81] : memref<2x32x128xf32, #tpu.memory_space<vmem>>, vector<1x32x128xf32>
    %194 = vector.shape_cast %193 : vector<1x32x128xf32> to vector<32x128xf32>
    %cst_82 = arith.constant dense<0.000000e+00> : vector<8x128xf32>
    %195 = tpu.matmul %192, %194, %cst_82 {dimension_numbers = #tpu.dot_dimension_numbers<[1], [0], [0], [1], [0, 0, 1, 1], [], []>} : vector<8x32xf32>, vector<32x128xf32>, vector<8x128xf32> -> vector<8x128xf32>
    %c1_83 = arith.constant 1 : index
    %c0_84 = arith.constant 0 : index
    %c0_85 = arith.constant 0 : index
    %196 = vector.load %arg5[%c1_83, %c0_84, %c0_85] : memref<2x32x128xf32, #tpu.memory_space<vmem>>, vector<1x32x128xf32>
    %197 = vector.shape_cast %196 : vector<1x32x128xf32> to vector<32x128xf32>
    %cst_86 = arith.constant dense<0.000000e+00> : vector<8x128xf32>
    %198 = tpu.matmul %165, %197, %cst_86 {dimension_numbers = #tpu.dot_dimension_numbers<[1], [0], [0], [1], [0, 0, 1, 1], [], []>} : vector<8x32xf32>, vector<32x128xf32>, vector<8x128xf32> -> vector<8x128xf32>
    %199 = arith.addf %195, %198 : vector<8x128xf32>
    %c1_87 = arith.constant 1 : index
    %c0_88 = arith.constant 0 : index
    %c0_89 = arith.constant 0 : index
    %200 = vector.load %arg6[%c1_87, %c0_88, %c0_89] : memref<2x1x128xf32, #tpu.memory_space<vmem>>, vector<1x1x128xf32>
    %201 = vector.shape_cast %200 : vector<1x1x128xf32> to vector<1x128xf32>
    %202 = vector.broadcast %201 : vector<1x128xf32> to vector<8x128xf32>
    %203 = arith.addf %199, %202 : vector<8x128xf32>
    %204 = vector.extract_strided_slice %203 {offsets = [0, 0], sizes = [8, 96], strides = [1, 1]} : vector<8x128xf32> to vector<8x96xf32>
    %205 = arith.negf %204 : vector<8x96xf32>
    %206 = math.exp %205 : vector<8x96xf32>
    %cst_90 = arith.constant 1.000000e+00 : f32
    %207 = vector.broadcast %cst_90 : f32 to vector<8x96xf32>
    %208 = arith.addf %207, %206 : vector<8x96xf32>
    %209 = arith.divf %207, %208 : vector<8x96xf32>
    %210 = vector.extract_strided_slice %203 {offsets = [0, 96], sizes = [8, 32], strides = [1, 1]} : vector<8x128xf32> to vector<8x32xf32>
    %211 = math.tanh %210 : vector<8x32xf32>
    %212 = vector.extract_strided_slice %209 {offsets = [0, 0], sizes = [8, 32], strides = [1, 1]} : vector<8x96xf32> to vector<8x32xf32>
    %213 = vector.extract_strided_slice %209 {offsets = [0, 32], sizes = [8, 32], strides = [1, 1]} : vector<8x96xf32> to vector<8x32xf32>
    %214 = vector.extract_strided_slice %209 {offsets = [0, 64], sizes = [8, 32], strides = [1, 1]} : vector<8x96xf32> to vector<8x32xf32>
    %215 = arith.mulf %213, %163 : vector<8x32xf32>
    %216 = arith.mulf %212, %211 : vector<8x32xf32>
    %217 = arith.addf %215, %216 : vector<8x32xf32>
    %218 = math.tanh %217 : vector<8x32xf32>
    %219 = arith.mulf %214, %218 : vector<8x32xf32>
    %220 = arith.index_cast %c3_i32 : i32 to index
    %c0_91 = arith.constant 0 : index
    %c0_92 = arith.constant 0 : index
    %221 = vector.load %arg7[%220, %c0_91, %c0_92] : memref<8x8x32xf32, #tpu.memory_space<vmem>>, vector<1x8x32xf32>
    %222 = vector.shape_cast %221 : vector<1x8x32xf32> to vector<8x32xf32>
    %223 = vector.shape_cast %219 : vector<8x32xf32> to vector<1x8x32xf32>
    tpu.vector_store %arg7[%220, %c0_91, %c0_92], %223 {strides = array<i32>} : memref<8x8x32xf32, #tpu.memory_space<vmem>>, vector<1x8x32xf32>,
    %c4_i32 = arith.constant 4 : i32
    %224 = arith.index_cast %c4_i32 : i32 to index
    %c0_93 = arith.constant 0 : index
    %c0_94 = arith.constant 0 : index
    %225 = vector.load %arg1[%224, %c0_93, %c0_94] : memref<8x8x128xf32, #tpu.memory_space<vmem>>, vector<1x8x128xf32>
    %226 = vector.shape_cast %225 : vector<1x8x128xf32> to vector<8x128xf32>
    %c0_95 = arith.constant 0 : index
    %c0_96 = arith.constant 0 : index
    %c0_97 = arith.constant 0 : index
    %227 = vector.load %arg5[%c0_95, %c0_96, %c0_97] : memref<2x32x128xf32, #tpu.memory_space<vmem>>, vector<1x32x128xf32>
    %228 = vector.shape_cast %227 : vector<1x32x128xf32> to vector<32x128xf32>
    %cst_98 = arith.constant dense<0.000000e+00> : vector<8x128xf32>
    %229 = tpu.matmul %192, %228, %cst_98 {dimension_numbers = #tpu.dot_dimension_numbers<[1], [0], [0], [1], [0, 0, 1, 1], [], []>} : vector<8x32xf32>, vector<32x128xf32>, vector<8x128xf32> -> vector<8x128xf32>
    %230 = arith.addf %226, %229 : vector<8x128xf32>
    %231 = vector.extract_strided_slice %230 {offsets = [0, 0], sizes = [8, 96], strides = [1, 1]} : vector<8x128xf32> to vector<8x96xf32>
    %232 = arith.negf %231 : vector<8x96xf32>
    %233 = math.exp %232 : vector<8x96xf32>
    %cst_99 = arith.constant 1.000000e+00 : f32
    %234 = vector.broadcast %cst_99 : f32 to vector<8x96xf32>
    %235 = arith.addf %234, %233 : vector<8x96xf32>
    %236 = arith.divf %234, %235 : vector<8x96xf32>
    %237 = vector.extract_strided_slice %230 {offsets = [0, 96], sizes = [8, 32], strides = [1, 1]} : vector<8x128xf32> to vector<8x32xf32>
    %238 = math.tanh %237 : vector<8x32xf32>
    %239 = vector.extract_strided_slice %236 {offsets = [0, 0], sizes = [8, 32], strides = [1, 1]} : vector<8x96xf32> to vector<8x32xf32>
    %240 = vector.extract_strided_slice %236 {offsets = [0, 32], sizes = [8, 32], strides = [1, 1]} : vector<8x96xf32> to vector<8x32xf32>
    %241 = vector.extract_strided_slice %236 {offsets = [0, 64], sizes = [8, 32], strides = [1, 1]} : vector<8x96xf32> to vector<8x32xf32>
    %242 = arith.mulf %240, %190 : vector<8x32xf32>
    %243 = arith.mulf %239, %238 : vector<8x32xf32>
    %244 = arith.addf %242, %243 : vector<8x32xf32>
    %245 = math.tanh %244 : vector<8x32xf32>
    %246 = arith.mulf %241, %245 : vector<8x32xf32>
    %c1_100 = arith.constant 1 : index
    %c0_101 = arith.constant 0 : index
    %c0_102 = arith.constant 0 : index
    %247 = vector.load %arg4[%c1_100, %c0_101, %c0_102] : memref<2x32x128xf32, #tpu.memory_space<vmem>>, vector<1x32x128xf32>
    %248 = vector.shape_cast %247 : vector<1x32x128xf32> to vector<32x128xf32>
    %cst_103 = arith.constant dense<0.000000e+00> : vector<8x128xf32>
    %249 = tpu.matmul %246, %248, %cst_103 {dimension_numbers = #tpu.dot_dimension_numbers<[1], [0], [0], [1], [0, 0, 1, 1], [], []>} : vector<8x32xf32>, vector<32x128xf32>, vector<8x128xf32> -> vector<8x128xf32>
    %c1_104 = arith.constant 1 : index
    %c0_105 = arith.constant 0 : index
    %c0_106 = arith.constant 0 : index
    %250 = vector.load %arg5[%c1_104, %c0_105, %c0_106] : memref<2x32x128xf32, #tpu.memory_space<vmem>>, vector<1x32x128xf32>
    %251 = vector.shape_cast %250 : vector<1x32x128xf32> to vector<32x128xf32>
    %cst_107 = arith.constant dense<0.000000e+00> : vector<8x128xf32>
    %252 = tpu.matmul %219, %251, %cst_107 {dimension_numbers = #tpu.dot_dimension_numbers<[1], [0], [0], [1], [0, 0, 1, 1], [], []>} : vector<8x32xf32>, vector<32x128xf32>, vector<8x128xf32> -> vector<8x128xf32>
    %253 = arith.addf %249, %252 : vector<8x128xf32>
    %c1_108 = arith.constant 1 : index
    %c0_109 = arith.constant 0 : index
    %c0_110 = arith.constant 0 : index
    %254 = vector.load %arg6[%c1_108, %c0_109, %c0_110] : memref<2x1x128xf32, #tpu.memory_space<vmem>>, vector<1x1x128xf32>
    %255 = vector.shape_cast %254 : vector<1x1x128xf32> to vector<1x128xf32>
    %256 = vector.broadcast %255 : vector<1x128xf32> to vector<8x128xf32>
    %257 = arith.addf %253, %256 : vector<8x128xf32>
    %258 = vector.extract_strided_slice %257 {offsets = [0, 0], sizes = [8, 96], strides = [1, 1]} : vector<8x128xf32> to vector<8x96xf32>
    %259 = arith.negf %258 : vector<8x96xf32>
    %260 = math.exp %259 : vector<8x96xf32>
    %cst_111 = arith.constant 1.000000e+00 : f32
    %261 = vector.broadcast %cst_111 : f32 to vector<8x96xf32>
    %262 = arith.addf %261, %260 : vector<8x96xf32>
    %263 = arith.divf %261, %262 : vector<8x96xf32>
    %264 = vector.extract_strided_slice %257 {offsets = [0, 96], sizes = [8, 32], strides = [1, 1]} : vector<8x128xf32> to vector<8x32xf32>
    %265 = math.tanh %264 : vector<8x32xf32>
    %266 = vector.extract_strided_slice %263 {offsets = [0, 0], sizes = [8, 32], strides = [1, 1]} : vector<8x96xf32> to vector<8x32xf32>
    %267 = vector.extract_strided_slice %263 {offsets = [0, 32], sizes = [8, 32], strides = [1, 1]} : vector<8x96xf32> to vector<8x32xf32>
    %268 = vector.extract_strided_slice %263 {offsets = [0, 64], sizes = [8, 32], strides = [1, 1]} : vector<8x96xf32> to vector<8x32xf32>
    %269 = arith.mulf %267, %217 : vector<8x32xf32>
    %270 = arith.mulf %266, %265 : vector<8x32xf32>
    %271 = arith.addf %269, %270 : vector<8x32xf32>
    %272 = math.tanh %271 : vector<8x32xf32>
    %273 = arith.mulf %268, %272 : vector<8x32xf32>
    %274 = arith.index_cast %c4_i32 : i32 to index
    %c0_112 = arith.constant 0 : index
    %c0_113 = arith.constant 0 : index
    %275 = vector.load %arg7[%274, %c0_112, %c0_113] : memref<8x8x32xf32, #tpu.memory_space<vmem>>, vector<1x8x32xf32>
    %276 = vector.shape_cast %275 : vector<1x8x32xf32> to vector<8x32xf32>
    %277 = vector.shape_cast %273 : vector<8x32xf32> to vector<1x8x32xf32>
    tpu.vector_store %arg7[%274, %c0_112, %c0_113], %277 {strides = array<i32>} : memref<8x8x32xf32, #tpu.memory_space<vmem>>, vector<1x8x32xf32>,
    %c5_i32 = arith.constant 5 : i32
    %278 = arith.index_cast %c5_i32 : i32 to index
    %c0_114 = arith.constant 0 : index
    %c0_115 = arith.constant 0 : index
    %279 = vector.load %arg1[%278, %c0_114, %c0_115] : memref<8x8x128xf32, #tpu.memory_space<vmem>>, vector<1x8x128xf32>
    %280 = vector.shape_cast %279 : vector<1x8x128xf32> to vector<8x128xf32>
    %c0_116 = arith.constant 0 : index
    %c0_117 = arith.constant 0 : index
    %c0_118 = arith.constant 0 : index
    %281 = vector.load %arg5[%c0_116, %c0_117, %c0_118] : memref<2x32x128xf32, #tpu.memory_space<vmem>>, vector<1x32x128xf32>
    %282 = vector.shape_cast %281 : vector<1x32x128xf32> to vector<32x128xf32>
    %cst_119 = arith.constant dense<0.000000e+00> : vector<8x128xf32>
    %283 = tpu.matmul %246, %282, %cst_119 {dimension_numbers = #tpu.dot_dimension_numbers<[1], [0], [0], [1], [0, 0, 1, 1], [], []>} : vector<8x32xf32>, vector<32x128xf32>, vector<8x128xf32> -> vector<8x128xf32>
    %284 = arith.addf %280, %283 : vector<8x128xf32>
    %285 = vector.extract_strided_slice %284 {offsets = [0, 0], sizes = [8, 96], strides = [1, 1]} : vector<8x128xf32> to vector<8x96xf32>
    %286 = arith.negf %285 : vector<8x96xf32>
    %287 = math.exp %286 : vector<8x96xf32>
    %cst_120 = arith.constant 1.000000e+00 : f32
    %288 = vector.broadcast %cst_120 : f32 to vector<8x96xf32>
    %289 = arith.addf %288, %287 : vector<8x96xf32>
    %290 = arith.divf %288, %289 : vector<8x96xf32>
    %291 = vector.extract_strided_slice %284 {offsets = [0, 96], sizes = [8, 32], strides = [1, 1]} : vector<8x128xf32> to vector<8x32xf32>
    %292 = math.tanh %291 : vector<8x32xf32>
    %293 = vector.extract_strided_slice %290 {offsets = [0, 0], sizes = [8, 32], strides = [1, 1]} : vector<8x96xf32> to vector<8x32xf32>
    %294 = vector.extract_strided_slice %290 {offsets = [0, 32], sizes = [8, 32], strides = [1, 1]} : vector<8x96xf32> to vector<8x32xf32>
    %295 = vector.extract_strided_slice %290 {offsets = [0, 64], sizes = [8, 32], strides = [1, 1]} : vector<8x96xf32> to vector<8x32xf32>
    %296 = arith.mulf %294, %244 : vector<8x32xf32>
    %297 = arith.mulf %293, %292 : vector<8x32xf32>
    %298 = arith.addf %296, %297 : vector<8x32xf32>
    %299 = math.tanh %298 : vector<8x32xf32>
    %300 = arith.mulf %295, %299 : vector<8x32xf32>
    %c1_121 = arith.constant 1 : index
    %c0_122 = arith.constant 0 : index
    %c0_123 = arith.constant 0 : index
    %301 = vector.load %arg4[%c1_121, %c0_122, %c0_123] : memref<2x32x128xf32, #tpu.memory_space<vmem>>, vector<1x32x128xf32>
    %302 = vector.shape_cast %301 : vector<1x32x128xf32> to vector<32x128xf32>
    %cst_124 = arith.constant dense<0.000000e+00> : vector<8x128xf32>
    %303 = tpu.matmul %300, %302, %cst_124 {dimension_numbers = #tpu.dot_dimension_numbers<[1], [0], [0], [1], [0, 0, 1, 1], [], []>} : vector<8x32xf32>, vector<32x128xf32>, vector<8x128xf32> -> vector<8x128xf32>
    %c1_125 = arith.constant 1 : index
    %c0_126 = arith.constant 0 : index
    %c0_127 = arith.constant 0 : index
    %304 = vector.load %arg5[%c1_125, %c0_126, %c0_127] : memref<2x32x128xf32, #tpu.memory_space<vmem>>, vector<1x32x128xf32>
    %305 = vector.shape_cast %304 : vector<1x32x128xf32> to vector<32x128xf32>
    %cst_128 = arith.constant dense<0.000000e+00> : vector<8x128xf32>
    %306 = tpu.matmul %273, %305, %cst_128 {dimension_numbers = #tpu.dot_dimension_numbers<[1], [0], [0], [1], [0, 0, 1, 1], [], []>} : vector<8x32xf32>, vector<32x128xf32>, vector<8x128xf32> -> vector<8x128xf32>
    %307 = arith.addf %303, %306 : vector<8x128xf32>
    %c1_129 = arith.constant 1 : index
    %c0_130 = arith.constant 0 : index
    %c0_131 = arith.constant 0 : index
    %308 = vector.load %arg6[%c1_129, %c0_130, %c0_131] : memref<2x1x128xf32, #tpu.memory_space<vmem>>, vector<1x1x128xf32>
    %309 = vector.shape_cast %308 : vector<1x1x128xf32> to vector<1x128xf32>
    %310 = vector.broadcast %309 : vector<1x128xf32> to vector<8x128xf32>
    %311 = arith.addf %307, %310 : vector<8x128xf32>
    %312 = vector.extract_strided_slice %311 {offsets = [0, 0], sizes = [8, 96], strides = [1, 1]} : vector<8x128xf32> to vector<8x96xf32>
    %313 = arith.negf %312 : vector<8x96xf32>
    %314 = math.exp %313 : vector<8x96xf32>
    %cst_132 = arith.constant 1.000000e+00 : f32
    %315 = vector.broadcast %cst_132 : f32 to vector<8x96xf32>
    %316 = arith.addf %315, %314 : vector<8x96xf32>
    %317 = arith.divf %315, %316 : vector<8x96xf32>
    %318 = vector.extract_strided_slice %311 {offsets = [0, 96], sizes = [8, 32], strides = [1, 1]} : vector<8x128xf32> to vector<8x32xf32>
    %319 = math.tanh %318 : vector<8x32xf32>
    %320 = vector.extract_strided_slice %317 {offsets = [0, 0], sizes = [8, 32], strides = [1, 1]} : vector<8x96xf32> to vector<8x32xf32>
    %321 = vector.extract_strided_slice %317 {offsets = [0, 32], sizes = [8, 32], strides = [1, 1]} : vector<8x96xf32> to vector<8x32xf32>
    %322 = vector.extract_strided_slice %317 {offsets = [0, 64], sizes = [8, 32], strides = [1, 1]} : vector<8x96xf32> to vector<8x32xf32>
    %323 = arith.mulf %321, %271 : vector<8x32xf32>
    %324 = arith.mulf %320, %319 : vector<8x32xf32>
    %325 = arith.addf %323, %324 : vector<8x32xf32>
    %326 = math.tanh %325 : vector<8x32xf32>
    %327 = arith.mulf %322, %326 : vector<8x32xf32>
    %328 = arith.index_cast %c5_i32 : i32 to index
    %c0_133 = arith.constant 0 : index
    %c0_134 = arith.constant 0 : index
    %329 = vector.load %arg7[%328, %c0_133, %c0_134] : memref<8x8x32xf32, #tpu.memory_space<vmem>>, vector<1x8x32xf32>
    %330 = vector.shape_cast %329 : vector<1x8x32xf32> to vector<8x32xf32>
    %331 = vector.shape_cast %327 : vector<8x32xf32> to vector<1x8x32xf32>
    tpu.vector_store %arg7[%328, %c0_133, %c0_134], %331 {strides = array<i32>} : memref<8x8x32xf32, #tpu.memory_space<vmem>>, vector<1x8x32xf32>,
    %c6_i32 = arith.constant 6 : i32
    %332 = arith.index_cast %c6_i32 : i32 to index
    %c0_135 = arith.constant 0 : index
    %c0_136 = arith.constant 0 : index
    %333 = vector.load %arg1[%332, %c0_135, %c0_136] : memref<8x8x128xf32, #tpu.memory_space<vmem>>, vector<1x8x128xf32>
    %334 = vector.shape_cast %333 : vector<1x8x128xf32> to vector<8x128xf32>
    %c0_137 = arith.constant 0 : index
    %c0_138 = arith.constant 0 : index
    %c0_139 = arith.constant 0 : index
    %335 = vector.load %arg5[%c0_137, %c0_138, %c0_139] : memref<2x32x128xf32, #tpu.memory_space<vmem>>, vector<1x32x128xf32>
    %336 = vector.shape_cast %335 : vector<1x32x128xf32> to vector<32x128xf32>
    %cst_140 = arith.constant dense<0.000000e+00> : vector<8x128xf32>
    %337 = tpu.matmul %300, %336, %cst_140 {dimension_numbers = #tpu.dot_dimension_numbers<[1], [0], [0], [1], [0, 0, 1, 1], [], []>} : vector<8x32xf32>, vector<32x128xf32>, vector<8x128xf32> -> vector<8x128xf32>
    %338 = arith.addf %334, %337 : vector<8x128xf32>
    %339 = vector.extract_strided_slice %338 {offsets = [0, 0], sizes = [8, 96], strides = [1, 1]} : vector<8x128xf32> to vector<8x96xf32>
    %340 = arith.negf %339 : vector<8x96xf32>
    %341 = math.exp %340 : vector<8x96xf32>
    %cst_141 = arith.constant 1.000000e+00 : f32
    %342 = vector.broadcast %cst_141 : f32 to vector<8x96xf32>
    %343 = arith.addf %342, %341 : vector<8x96xf32>
    %344 = arith.divf %342, %343 : vector<8x96xf32>
    %345 = vector.extract_strided_slice %338 {offsets = [0, 96], sizes = [8, 32], strides = [1, 1]} : vector<8x128xf32> to vector<8x32xf32>
    %346 = math.tanh %345 : vector<8x32xf32>
    %347 = vector.extract_strided_slice %344 {offsets = [0, 0], sizes = [8, 32], strides = [1, 1]} : vector<8x96xf32> to vector<8x32xf32>
    %348 = vector.extract_strided_slice %344 {offsets = [0, 32], sizes = [8, 32], strides = [1, 1]} : vector<8x96xf32> to vector<8x32xf32>
    %349 = vector.extract_strided_slice %344 {offsets = [0, 64], sizes = [8, 32], strides = [1, 1]} : vector<8x96xf32> to vector<8x32xf32>
    %350 = arith.mulf %348, %298 : vector<8x32xf32>
    %351 = arith.mulf %347, %346 : vector<8x32xf32>
    %352 = arith.addf %350, %351 : vector<8x32xf32>
    %353 = math.tanh %352 : vector<8x32xf32>
    %354 = arith.mulf %349, %353 : vector<8x32xf32>
    %c1_142 = arith.constant 1 : index
    %c0_143 = arith.constant 0 : index
    %c0_144 = arith.constant 0 : index
    %355 = vector.load %arg4[%c1_142, %c0_143, %c0_144] : memref<2x32x128xf32, #tpu.memory_space<vmem>>, vector<1x32x128xf32>
    %356 = vector.shape_cast %355 : vector<1x32x128xf32> to vector<32x128xf32>
    %cst_145 = arith.constant dense<0.000000e+00> : vector<8x128xf32>
    %357 = tpu.matmul %354, %356, %cst_145 {dimension_numbers = #tpu.dot_dimension_numbers<[1], [0], [0], [1], [0, 0, 1, 1], [], []>} : vector<8x32xf32>, vector<32x128xf32>, vector<8x128xf32> -> vector<8x128xf32>
    %c1_146 = arith.constant 1 : index
    %c0_147 = arith.constant 0 : index
    %c0_148 = arith.constant 0 : index
    %358 = vector.load %arg5[%c1_146, %c0_147, %c0_148] : memref<2x32x128xf32, #tpu.memory_space<vmem>>, vector<1x32x128xf32>
    %359 = vector.shape_cast %358 : vector<1x32x128xf32> to vector<32x128xf32>
    %cst_149 = arith.constant dense<0.000000e+00> : vector<8x128xf32>
    %360 = tpu.matmul %327, %359, %cst_149 {dimension_numbers = #tpu.dot_dimension_numbers<[1], [0], [0], [1], [0, 0, 1, 1], [], []>} : vector<8x32xf32>, vector<32x128xf32>, vector<8x128xf32> -> vector<8x128xf32>
    %361 = arith.addf %357, %360 : vector<8x128xf32>
    %c1_150 = arith.constant 1 : index
    %c0_151 = arith.constant 0 : index
    %c0_152 = arith.constant 0 : index
    %362 = vector.load %arg6[%c1_150, %c0_151, %c0_152] : memref<2x1x128xf32, #tpu.memory_space<vmem>>, vector<1x1x128xf32>
    %363 = vector.shape_cast %362 : vector<1x1x128xf32> to vector<1x128xf32>
    %364 = vector.broadcast %363 : vector<1x128xf32> to vector<8x128xf32>
    %365 = arith.addf %361, %364 : vector<8x128xf32>
    %366 = vector.extract_strided_slice %365 {offsets = [0, 0], sizes = [8, 96], strides = [1, 1]} : vector<8x128xf32> to vector<8x96xf32>
    %367 = arith.negf %366 : vector<8x96xf32>
    %368 = math.exp %367 : vector<8x96xf32>
    %cst_153 = arith.constant 1.000000e+00 : f32
    %369 = vector.broadcast %cst_153 : f32 to vector<8x96xf32>
    %370 = arith.addf %369, %368 : vector<8x96xf32>
    %371 = arith.divf %369, %370 : vector<8x96xf32>
    %372 = vector.extract_strided_slice %365 {offsets = [0, 96], sizes = [8, 32], strides = [1, 1]} : vector<8x128xf32> to vector<8x32xf32>
    %373 = math.tanh %372 : vector<8x32xf32>
    %374 = vector.extract_strided_slice %371 {offsets = [0, 0], sizes = [8, 32], strides = [1, 1]} : vector<8x96xf32> to vector<8x32xf32>
    %375 = vector.extract_strided_slice %371 {offsets = [0, 32], sizes = [8, 32], strides = [1, 1]} : vector<8x96xf32> to vector<8x32xf32>
    %376 = vector.extract_strided_slice %371 {offsets = [0, 64], sizes = [8, 32], strides = [1, 1]} : vector<8x96xf32> to vector<8x32xf32>
    %377 = arith.mulf %375, %325 : vector<8x32xf32>
    %378 = arith.mulf %374, %373 : vector<8x32xf32>
    %379 = arith.addf %377, %378 : vector<8x32xf32>
    %380 = math.tanh %379 : vector<8x32xf32>
    %381 = arith.mulf %376, %380 : vector<8x32xf32>
    %382 = arith.index_cast %c6_i32 : i32 to index
    %c0_154 = arith.constant 0 : index
    %c0_155 = arith.constant 0 : index
    %383 = vector.load %arg7[%382, %c0_154, %c0_155] : memref<8x8x32xf32, #tpu.memory_space<vmem>>, vector<1x8x32xf32>
    %384 = vector.shape_cast %383 : vector<1x8x32xf32> to vector<8x32xf32>
    %385 = vector.shape_cast %381 : vector<8x32xf32> to vector<1x8x32xf32>
    tpu.vector_store %arg7[%382, %c0_154, %c0_155], %385 {strides = array<i32>} : memref<8x8x32xf32, #tpu.memory_space<vmem>>, vector<1x8x32xf32>,
    %c7_i32 = arith.constant 7 : i32
    %386 = arith.index_cast %c7_i32 : i32 to index
    %c0_156 = arith.constant 0 : index
    %c0_157 = arith.constant 0 : index
    %387 = vector.load %arg1[%386, %c0_156, %c0_157] : memref<8x8x128xf32, #tpu.memory_space<vmem>>, vector<1x8x128xf32>
    %388 = vector.shape_cast %387 : vector<1x8x128xf32> to vector<8x128xf32>
    %c0_158 = arith.constant 0 : index
    %c0_159 = arith.constant 0 : index
    %c0_160 = arith.constant 0 : index
    %389 = vector.load %arg5[%c0_158, %c0_159, %c0_160] : memref<2x32x128xf32, #tpu.memory_space<vmem>>, vector<1x32x128xf32>
    %390 = vector.shape_cast %389 : vector<1x32x128xf32> to vector<32x128xf32>
    %cst_161 = arith.constant dense<0.000000e+00> : vector<8x128xf32>
    %391 = tpu.matmul %354, %390, %cst_161 {dimension_numbers = #tpu.dot_dimension_numbers<[1], [0], [0], [1], [0, 0, 1, 1], [], []>} : vector<8x32xf32>, vector<32x128xf32>, vector<8x128xf32> -> vector<8x128xf32>
    %392 = arith.addf %388, %391 : vector<8x128xf32>
    %393 = vector.extract_strided_slice %392 {offsets = [0, 0], sizes = [8, 96], strides = [1, 1]} : vector<8x128xf32> to vector<8x96xf32>
    %394 = arith.negf %393 : vector<8x96xf32>
    %395 = math.exp %394 : vector<8x96xf32>
    %cst_162 = arith.constant 1.000000e+00 : f32
    %396 = vector.broadcast %cst_162 : f32 to vector<8x96xf32>
    %397 = arith.addf %396, %395 : vector<8x96xf32>
    %398 = arith.divf %396, %397 : vector<8x96xf32>
    %399 = vector.extract_strided_slice %392 {offsets = [0, 96], sizes = [8, 32], strides = [1, 1]} : vector<8x128xf32> to vector<8x32xf32>
    %400 = math.tanh %399 : vector<8x32xf32>
    %401 = vector.extract_strided_slice %398 {offsets = [0, 0], sizes = [8, 32], strides = [1, 1]} : vector<8x96xf32> to vector<8x32xf32>
    %402 = vector.extract_strided_slice %398 {offsets = [0, 32], sizes = [8, 32], strides = [1, 1]} : vector<8x96xf32> to vector<8x32xf32>
    %403 = vector.extract_strided_slice %398 {offsets = [0, 64], sizes = [8, 32], strides = [1, 1]} : vector<8x96xf32> to vector<8x32xf32>
    %404 = arith.mulf %402, %352 : vector<8x32xf32>
    %405 = arith.mulf %401, %400 : vector<8x32xf32>
    %406 = arith.addf %404, %405 : vector<8x32xf32>
    %407 = math.tanh %406 : vector<8x32xf32>
    %408 = arith.mulf %403, %407 : vector<8x32xf32>
    %c1_163 = arith.constant 1 : index
    %c0_164 = arith.constant 0 : index
    %c0_165 = arith.constant 0 : index
    %409 = vector.load %arg4[%c1_163, %c0_164, %c0_165] : memref<2x32x128xf32, #tpu.memory_space<vmem>>, vector<1x32x128xf32>
    %410 = vector.shape_cast %409 : vector<1x32x128xf32> to vector<32x128xf32>
    %cst_166 = arith.constant dense<0.000000e+00> : vector<8x128xf32>
    %411 = tpu.matmul %408, %410, %cst_166 {dimension_numbers = #tpu.dot_dimension_numbers<[1], [0], [0], [1], [0, 0, 1, 1], [], []>} : vector<8x32xf32>, vector<32x128xf32>, vector<8x128xf32> -> vector<8x128xf32>
    %c1_167 = arith.constant 1 : index
    %c0_168 = arith.constant 0 : index
    %c0_169 = arith.constant 0 : index
    %412 = vector.load %arg5[%c1_167, %c0_168, %c0_169] : memref<2x32x128xf32, #tpu.memory_space<vmem>>, vector<1x32x128xf32>
    %413 = vector.shape_cast %412 : vector<1x32x128xf32> to vector<32x128xf32>
    %cst_170 = arith.constant dense<0.000000e+00> : vector<8x128xf32>
    %414 = tpu.matmul %381, %413, %cst_170 {dimension_numbers = #tpu.dot_dimension_numbers<[1], [0], [0], [1], [0, 0, 1, 1], [], []>} : vector<8x32xf32>, vector<32x128xf32>, vector<8x128xf32> -> vector<8x128xf32>
    %415 = arith.addf %411, %414 : vector<8x128xf32>
    %c1_171 = arith.constant 1 : index
    %c0_172 = arith.constant 0 : index
    %c0_173 = arith.constant 0 : index
    %416 = vector.load %arg6[%c1_171, %c0_172, %c0_173] : memref<2x1x128xf32, #tpu.memory_space<vmem>>, vector<1x1x128xf32>
    %417 = vector.shape_cast %416 : vector<1x1x128xf32> to vector<1x128xf32>
    %418 = vector.broadcast %417 : vector<1x128xf32> to vector<8x128xf32>
    %419 = arith.addf %415, %418 : vector<8x128xf32>
    %420 = vector.extract_strided_slice %419 {offsets = [0, 0], sizes = [8, 96], strides = [1, 1]} : vector<8x128xf32> to vector<8x96xf32>
    %421 = arith.negf %420 : vector<8x96xf32>
    %422 = math.exp %421 : vector<8x96xf32>
    %cst_174 = arith.constant 1.000000e+00 : f32
    %423 = vector.broadcast %cst_174 : f32 to vector<8x96xf32>
    %424 = arith.addf %423, %422 : vector<8x96xf32>
    %425 = arith.divf %423, %424 : vector<8x96xf32>
    %426 = vector.extract_strided_slice %419 {offsets = [0, 96], sizes = [8, 32], strides = [1, 1]} : vector<8x128xf32> to vector<8x32xf32>
    %427 = math.tanh %426 : vector<8x32xf32>
    %428 = vector.extract_strided_slice %425 {offsets = [0, 0], sizes = [8, 32], strides = [1, 1]} : vector<8x96xf32> to vector<8x32xf32>
    %429 = vector.extract_strided_slice %425 {offsets = [0, 32], sizes = [8, 32], strides = [1, 1]} : vector<8x96xf32> to vector<8x32xf32>
    %430 = vector.extract_strided_slice %425 {offsets = [0, 64], sizes = [8, 32], strides = [1, 1]} : vector<8x96xf32> to vector<8x32xf32>
    %431 = arith.mulf %429, %379 : vector<8x32xf32>
    %432 = arith.mulf %428, %427 : vector<8x32xf32>
    %433 = arith.addf %431, %432 : vector<8x32xf32>
    %434 = math.tanh %433 : vector<8x32xf32>
    %435 = arith.mulf %430, %434 : vector<8x32xf32>
    %436 = arith.index_cast %c7_i32 : i32 to index
    %c0_175 = arith.constant 0 : index
    %c0_176 = arith.constant 0 : index
    %437 = vector.load %arg7[%436, %c0_175, %c0_176] : memref<8x8x32xf32, #tpu.memory_space<vmem>>, vector<1x8x32xf32>
    %438 = vector.shape_cast %437 : vector<1x8x32xf32> to vector<8x32xf32>
    %439 = vector.shape_cast %435 : vector<8x32xf32> to vector<1x8x32xf32>
    tpu.vector_store %arg7[%436, %c0_175, %c0_176], %439 {strides = array<i32>} : memref<8x8x32xf32, #tpu.memory_space<vmem>>, vector<1x8x32xf32>,
    %c8_i32 = arith.constant 8 : i32
    return
  }
  func.func @transform_0(%arg0: i32) -> (i32, i32, i32) {
    %c0_i32 = arith.constant 0 : i32
    %c0_i32_0 = arith.constant 0 : i32
    %c0_i32_1 = arith.constant 0 : i32
    return %c0_i32, %arg0, %c0_i32_0 : i32, i32, i32
  }
  func.func @transform_1(%arg0: i32) -> (i32, i32, i32) {
    %c0_i32 = arith.constant 0 : i32
    %c0_i32_0 = arith.constant 0 : i32
    %c0_i32_1 = arith.constant 0 : i32
    return %c0_i32, %arg0, %c0_i32_0 : i32, i32, i32
  }
  func.func @transform_2(%arg0: i32) -> (i32, i32, i32) {
    %c0_i32 = arith.constant 0 : i32
    %c0_i32_0 = arith.constant 0 : i32
    %c0_i32_1 = arith.constant 0 : i32
    return %c0_i32, %arg0, %c0_i32_0 : i32, i32, i32
  }
  func.func @transform_3(%arg0: i32) -> (i32, i32, i32) {
    %c0_i32 = arith.constant 0 : i32
    %c0_i32_0 = arith.constant 0 : i32
    %c0_i32_1 = arith.constant 0 : i32
    %c0_i32_2 = arith.constant 0 : i32
    return %c0_i32, %c0_i32_0, %c0_i32_1 : i32, i32, i32
  }
  func.func @transform_4(%arg0: i32) -> (i32, i32, i32) {
    %c0_i32 = arith.constant 0 : i32
    %c0_i32_0 = arith.constant 0 : i32
    %c0_i32_1 = arith.constant 0 : i32
    %c0_i32_2 = arith.constant 0 : i32
    return %c0_i32, %c0_i32_0, %c0_i32_1 : i32, i32, i32
  }
  func.func @transform_5(%arg0: i32) -> (i32, i32, i32) {
    %c0_i32 = arith.constant 0 : i32
    %c0_i32_0 = arith.constant 0 : i32
    %c0_i32_1 = arith.constant 0 : i32
    %c0_i32_2 = arith.constant 0 : i32
    return %c0_i32, %c0_i32_0, %c0_i32_1 : i32, i32, i32
  }
  func.func @transform_6(%arg0: i32) -> (i32, i32, i32) {
    %c0_i32 = arith.constant 0 : i32
    %c0_i32_0 = arith.constant 0 : i32
    %c0_i32_1 = arith.constant 0 : i32
    return %c0_i32, %arg0, %c0_i32_0 : i32, i32, i32
  }
}

</mosaic_0001>

<llo_original>
// kernel: tpu_custom_call.1
$region0: #{tpu_custom_call.1}
  #allocation0 [shape = 'u32[]', space=smem, size = 0x4, offset = 0x4, fixed_abs, tag = 'smem constant byte address 0x4 - core index']
  #allocation1 [shape = 'u32[72,128]{1,0:T(1,128)}', space=vmem, size = 0x9000, scoped, tag = 'internal scratch']
  %s0 = inlined_call_operand.hbm [shape: f32[8,8,128], index: 0, kind: input, shape index: {}]
  %s1 = inlined_call_operand.hbm [shape: f32[2,8,32], index: 1, kind: input, shape index: {}]
  %s2 = inlined_call_operand.hbm [shape: f32[2,8,32], index: 2, kind: input, shape index: {}]
  %s3 = inlined_call_operand.hbm [shape: f32[2,32,128], index: 3, kind: input, shape index: {}]
  %s4 = inlined_call_operand.hbm [shape: f32[2,32,128], index: 4, kind: input, shape index: {}]
  %s5 = inlined_call_operand.vmem [shape: f32[2,1,128], index: 5, kind: input, shape index: {}]
  %s6 = inlined_call_operand.hbm [shape: f32[8,8,32], index: 6, kind: output, shape index: {}]
  %s7 = sld [smem:[#allocation0]]
  $region54: #{tpu_custom_call.1} parent=0
    _
  %s9 = ssub.s32 1, %s7
  %s10 = scalar_select 0, %s9, %s7
  $region1: #{tpu_custom_call.1} parent=0
    #allocation2 [shape = 'u8[32768]{0}', space=vmem, size = 0x8000, scoped, tag = 'input window, operand 0, single buffered']
    #allocation3 [shape = 's32[1]{0}', space=sflag, size = 0x4, scoped, tag = 'scoped memory for tpu_custom_call.1']
    #allocation4 [shape = 's32[1]{0}', space=sflag, size = 0x4, scoped, tag = 'scoped memory for tpu_custom_call.1']
    #allocation5 [shape = 'u8[8192]{0}', space=vmem, size = 0x2000, scoped, tag = 'input window, operand 1, single buffered']
    #allocation6 [shape = 's32[1]{0}', space=sflag, size = 0x4, scoped, tag = 'scoped memory for tpu_custom_call.1']
    #allocation7 [shape = 'u8[8192]{0}', space=vmem, size = 0x2000, scoped, tag = 'input window, operand 2, single buffered']
    #allocation8 [shape = 'u8[32768]{0}', space=vmem, size = 0x8000, scoped, tag = 'input window, operand 3, single buffered']
    #allocation9 [shape = 's32[1]{0}', space=sflag, size = 0x4, scoped, tag = 'scoped memory for tpu_custom_call.1']
    #allocation10 [shape = 'u8[32768]{0}', space=vmem, size = 0x8000, scoped, tag = 'input window, operand 4, single buffered']
    #allocation11 [shape = 'u8[32768]{0}', space=vmem, size = 0x8000, scoped, tag = 'output window, operand 0, single buffered']
    %11 = vsyncpa [#allocation3], 0
    %12 = vsyncpa [#allocation6], 0
    %13 = vsyncpa [#allocation9], 0
    %14 = vsyncpa [#allocation4], 0
    // Predicated region
    $region2: #{tpu_custom_call.1} parent=1 // pred_check
      _
    $region3: #{tpu_custom_call.1} parent=1 // pred_check_branch
      %16 = sbr.rel (0) target = $region5
    $region4: #{tpu_custom_call.1} parent=1 // pred_region
      %18 = vsyncadd [#allocation3], 0
      %s19 = sshll.u32 %s0, 4
      %s20 = int_to_ptr.hbm [resolvable:$true] %s19
      %s21 = sshll.u32 [#allocation2], 4
      %s22 = int_to_ptr.vmem [resolvable:$true] %s21
      %27 = dma.hbm_to_vmem [thread:$0]  %s20, 1024, %s22, [#allocation3], 128, 128, 8
    $region5: #{tpu_custom_call.1} parent=1 // pred_fallthru
      _
    // Predicated region
    $region6: #{tpu_custom_call.1} parent=1 // pred_check
      _
    $region7: #{tpu_custom_call.1} parent=1 // pred_check_branch
      %29 = sbr.rel (0) target = $region9
    $region8: #{tpu_custom_call.1} parent=1 // pred_region
      %31 = vsyncadd [#allocation6], 0
      %s32 = sshll.u32 %s1, 4
      %s33 = int_to_ptr.hbm [resolvable:$true] %s32
      %s34 = sshll.u32 [#allocation5], 4
      %s35 = int_to_ptr.vmem [resolvable:$true] %s34
      %40 = dma.hbm_to_vmem [thread:$0]  %s33, 256, %s35, [#allocation6], 128, 128, 8
    $region9: #{tpu_custom_call.1} parent=1 // pred_fallthru
      _
    // Predicated region
    $region10: #{tpu_custom_call.1} parent=1 // pred_check
      _
    $region11: #{tpu_custom_call.1} parent=1 // pred_check_branch
      %42 = sbr.rel (0) target = $region13
    $region12: #{tpu_custom_call.1} parent=1 // pred_region
      %44 = vsyncadd [#allocation6], 0
      %s45 = sshll.u32 %s2, 4
      %s46 = int_to_ptr.hbm [resolvable:$true] %s45
      %s47 = sshll.u32 [#allocation7], 4
      %s48 = int_to_ptr.vmem [resolvable:$true] %s47
      %53 = dma.hbm_to_vmem [thread:$0]  %s46, 256, %s48, [#allocation6], 128, 128, 8
    $region13: #{tpu_custom_call.1} parent=1 // pred_fallthru
      _
    // Predicated region
    $region14: #{tpu_custom_call.1} parent=1 // pred_check
      _
    $region15: #{tpu_custom_call.1} parent=1 // pred_check_branch
      %55 = sbr.rel (0) target = $region17
    $region16: #{tpu_custom_call.1} parent=1 // pred_region
      %57 = vsyncadd [#allocation9], 0
      %s58 = sshll.u32 %s3, 4
      %s59 = int_to_ptr.hbm [resolvable:$true] %s58
      %s60 = sshll.u32 [#allocation8], 4
      %s61 = int_to_ptr.vmem [resolvable:$true] %s60
      %66 = dma.hbm_to_vmem [thread:$0]  %s59, 1024, %s61, [#allocation9], 128, 128, 8
    $region17: #{tpu_custom_call.1} parent=1 // pred_fallthru
      _
    // Predicated region
    $region18: #{tpu_custom_call.1} parent=1 // pred_check
      _
    $region19: #{tpu_custom_call.1} parent=1 // pred_check_branch
      %68 = sbr.rel (0) target = $region21
    $region20: #{tpu_custom_call.1} parent=1 // pred_region
      %70 = vsyncadd [#allocation9], 0
      %s71 = sshll.u32 %s4, 4
      %s72 = int_to_ptr.hbm [resolvable:$true] %s71
      %s73 = sshll.u32 [#allocation10], 4
      %s74 = int_to_ptr.vmem [resolvable:$true] %s73
      %79 = dma.hbm_to_vmem [thread:$0]  %s72, 1024, %s74, [#allocation9], 128, 128, 8
    $region21: #{tpu_custom_call.1} parent=1 // pred_fallthru
      _
    // Predicated region
    $region22: #{tpu_custom_call.1} parent=1 // pred_check
      _
    $region23: #{tpu_custom_call.1} parent=1 // pred_check_branch
      %81 = sbr.rel (0) target = $region25
    $region24: #{tpu_custom_call.1} parent=1 // pred_region
      _
    $region25: #{tpu_custom_call.1} parent=1 // pred_fallthru
      _
    // Predicated region
    $region26: #{tpu_custom_call.1} parent=1 // pred_check
      _
    $region27: #{tpu_custom_call.1} parent=1 // pred_check_branch
      %83 = sbr.rel (0) target = $region29
    $region28: #{tpu_custom_call.1} parent=1 // pred_region
      %85 = dma.done [#allocation3], 1024
    $region29: #{tpu_custom_call.1} parent=1 // pred_fallthru
      _
    // Predicated region
    $region30: #{tpu_custom_call.1} parent=1 // pred_check
      _
    $region31: #{tpu_custom_call.1} parent=1 // pred_check_branch
      %87 = sbr.rel (0) target = $region33
    $region32: #{tpu_custom_call.1} parent=1 // pred_region
      %89 = dma.done [#allocation6], 256
    $region33: #{tpu_custom_call.1} parent=1 // pred_fallthru
      _
    // Predicated region
    $region34: #{tpu_custom_call.1} parent=1 // pred_check
      _
    $region35: #{tpu_custom_call.1} parent=1 // pred_check_branch
      %91 = sbr.rel (0) target = $region37
    $region36: #{tpu_custom_call.1} parent=1 // pred_region
      %93 = dma.done [#allocation6], 256
    $region37: #{tpu_custom_call.1} parent=1 // pred_fallthru
      _
    // Predicated region
    $region38: #{tpu_custom_call.1} parent=1 // pred_check
      _
    $region39: #{tpu_custom_call.1} parent=1 // pred_check_branch
      %95 = sbr.rel (0) target = $region41
    $region40: #{tpu_custom_call.1} parent=1 // pred_region
      %97 = dma.done [#allocation9], 1024
    $region41: #{tpu_custom_call.1} parent=1 // pred_fallthru
      _
    // Predicated region
    $region42: #{tpu_custom_call.1} parent=1 // pred_check
      _
    $region43: #{tpu_custom_call.1} parent=1 // pred_check_branch
      %99 = sbr.rel (0) target = $region45
    $region44: #{tpu_custom_call.1} parent=1 // pred_region
      %101 = dma.done [#allocation9], 1024
    $region45: #{tpu_custom_call.1} parent=1 // pred_fallthru
      _
    %v102 = vld [vmem:[#allocation5] sm:$0xff]
    %s103 = scalar_lea.vmem [#allocation5], 8
    %v104 = vld [vmem:[%s103] sm:$0xff]
    %v105 = vld [vmem:[#allocation7] sm:$0xff]
    %s106 = scalar_lea.vmem [#allocation7], 8
    %v107 = vld [vmem:[%s106] sm:$0xff]
    %v108 = vld [vmem:[#allocation2] sm:$0xff]
    %v109 = vld [vmem:[#allocation10] sm:$0xff]
    %v110 = vld [vmem:[#allocation10 + $0x8] sm:$0xff]
    %v111 = vld [vmem:[#allocation10 + $0x10] sm:$0xff]
    %v112 = vld [vmem:[#allocation10 + $0x18] sm:$0xff]
    %vm113 = vcmask 261120
    %v115 = vsel %vm113, %v102, 0
    %117 = vmatpush.msra.mxu0 0.0
    %118 = vmatpush.msra.mxu0 0.0
    %119 = vmatpush.msra.mxu0 0.0
    %120 = vmatpush.msra.mxu0 0.0
    %121 = vmatpush.msra.mxu0 0.0
    %122 = vmatpush.msra.mxu0 0.0
    %123 = vmatpush.msra.mxu0 0.0
    %124 = vmatpush.msra.mxu0 0.0
    %125 = vmatpush.msra.mxu0 0.0
    %126 = vmatpush.msra.mxu0 0.0
    %127 = vmatpush.msra.mxu0 0.0
    %128 = vmatpush.msra.mxu0 0.0
    %129 = vmatpush.msra.mxu0 %v112
    %130 = vmatpush.msra.mxu0 %v111
    %131 = vmatpush.msra.mxu0 %v110
    %132 = vmatpush.msra.mxu0 %v109
    %133 = vmatmul.f32.gmra.mxu0 %v115
    %v134 = vpop.f32.mrf.mxu0
    %v135 = vadd.f32 0.0, %v134
    %136 = vdwg.mxu0
    %v137 = vadd.f32 %v108, %v135
    %v138 = vxor.u32 %v137, 2147483648
    %v139 = vmul.f32 %v138, 1.442695
    %v140 = vpow.pop %v139
    %v141 = vadd.f32 %v140, 1.0
    %v142 = vrcp.pop %v141
    %v143 = vmul.f32 %v141, %v142
    %v144 = vsub.f32 1.0, %v143
    %v145 = vmul.f32 %v142, %v144
    %v146 = vadd.f32 %v142, %v145
    %vm147 = vweird.f32 %v141
    %vm148 = vweird.f32 %v142
    %vm149 = vmor %vm147, %vm148
    %v150 = vsel %vm149, %v142, %v146
    %v151 = vand.u32 2147483647, %v141
    %vm152 = vcmp.eq.f32.partialorder %v151, 8.507059e+37
    %v153 = vand.u32 %v141, 2147483648
    %v154 = vor.u32 1.1754944e-38, %v153
    %v155 = vsel %vm152, %v154, %v150
    %v156 = vmul.f32 1.0, %v155
    %v157 = vtanh.pop %v137
    %159 = vrot.lane.b32.xlu0 %v105, 32
    %v160 = vpop.permute.xlu0 %159
    %v162 = vmul.f32 %v156, %v160
    %164 = vrot.lane.b32.xlu0 %v157, 32
    %v165 = vpop.permute.xlu0 %164
    %v167 = vmul.f32 %v156, %v165
    %169 = vrot.lane.b32.xlu0 %v167, 32
    %v170 = vpop.permute.xlu0 %169
    %v172 = vadd.f32 %v162, %v170
    %v173 = vtanh.pop %v172
    %175 = vrot.lane.b32.xlu0 %v173, 32
    %v176 = vpop.permute.xlu0 %175
    %v178 = vmul.f32 %v156, %v176
    %s179 = scalar_lea.vmem [#allocation8], 32
    %v180 = vld [vmem:[%s179] sm:$0xff]
    %v181 = vld [vmem:[%s179 + $0x8] sm:$0xff]
    %v182 = vld [vmem:[%s179 + $0x10] sm:$0xff]
    %v183 = vld [vmem:[%s179 + $0x18] sm:$0xff]
    %s184 = scalar_lea.vmem [#allocation10], 32
    %v185 = vld [vmem:[%s184] sm:$0xff]
    %v186 = vld [vmem:[%s184 + $0x8] sm:$0xff]
    %v187 = vld [vmem:[%s184 + $0x10] sm:$0xff]
    %v188 = vld [vmem:[%s184 + $0x18] sm:$0xff]
    %v190 = vsel %vm113, %v104, 0
    %192 = vmatpush.msra.mxu0 0.0
    %193 = vmatpush.msra.mxu0 0.0
    %194 = vmatpush.msra.mxu0 0.0
    %195 = vmatpush.msra.mxu0 0.0
    %196 = vmatpush.msra.mxu0 0.0
    %197 = vmatpush.msra.mxu0 0.0
    %198 = vmatpush.msra.mxu0 0.0
    %199 = vmatpush.msra.mxu0 0.0
    %200 = vmatpush.msra.mxu0 0.0
    %201 = vmatpush.msra.mxu0 0.0
    %202 = vmatpush.msra.mxu0 0.0
    %203 = vmatpush.msra.mxu0 0.0
    %204 = vmatpush.msra.mxu0 %v188
    %205 = vmatpush.msra.mxu0 %v187
    %206 = vmatpush.msra.mxu0 %v186
    %207 = vmatpush.msra.mxu0 %v185
    %208 = vmatmul.f32.gmra.mxu0 %v190
    %v209 = vpop.f32.mrf.mxu0
    %v210 = vadd.f32 0.0, %v209
    %211 = vdwg.mxu0
    %213 = vrot.lane.b32.xlu0 %v178, 64
    %v214 = vpop.permute.xlu0 %213
    %v215 = vsel %vm113, %v214, 0
    %217 = vmatpush.msra.mxu0 0.0
    %218 = vmatpush.msra.mxu0 0.0
    %219 = vmatpush.msra.mxu0 0.0
    %220 = vmatpush.msra.mxu0 0.0
    %221 = vmatpush.msra.mxu0 0.0
    %222 = vmatpush.msra.mxu0 0.0
    %223 = vmatpush.msra.mxu0 0.0
    %224 = vmatpush.msra.mxu0 0.0
    %225 = vmatpush.msra.mxu0 0.0
    %226 = vmatpush.msra.mxu0 0.0
    %227 = vmatpush.msra.mxu0 0.0
    %228 = vmatpush.msra.mxu0 0.0
    %229 = vmatpush.msra.mxu0 %v183
    %230 = vmatpush.msra.mxu0 %v182
    %231 = vmatpush.msra.mxu0 %v181
    %232 = vmatpush.msra.mxu0 %v180
    %233 = vmatmul.f32.gmra.mxu0 %v215
    %v234 = vpop.f32.mrf.mxu0
    %v235 = vadd.f32 %v210, %v234
    %236 = vdwg.mxu0
    %s237 = scalar_lea.vmem %s5, 1
    %v238 = vld [vmem:[%s237] sm:$0x1]
    %v240 = vperm.slane %v238, 0
    %v242 = vadd.f32 %v235, %v240
    %v243 = vxor.u32 %v242, 2147483648
    %v244 = vmul.f32 %v243, 1.442695
    %v245 = vpow.pop %v244
    %v246 = vadd.f32 %v245, 1.0
    %v247 = vrcp.pop %v246
    %v248 = vmul.f32 %v246, %v247
    %v249 = vsub.f32 1.0, %v248
    %v250 = vmul.f32 %v247, %v249
    %v251 = vadd.f32 %v247, %v250
    %vm252 = vweird.f32 %v246
    %vm253 = vweird.f32 %v247
    %vm254 = vmor %vm252, %vm253
    %v255 = vsel %vm254, %v247, %v251
    %v256 = vand.u32 2147483647, %v246
    %vm257 = vcmp.eq.f32.partialorder %v256, 8.507059e+37
    %v258 = vand.u32 %v246, 2147483648
    %v259 = vor.u32 1.1754944e-38, %v258
    %v260 = vsel %vm257, %v259, %v255
    %v261 = vmul.f32 1.0, %v260
    %v262 = vtanh.pop %v242
    %264 = vrot.lane.b32.xlu0 %v107, 32
    %v265 = vpop.permute.xlu0 %264
    %v267 = vmul.f32 %v261, %v265
    %269 = vrot.lane.b32.xlu0 %v262, 32
    %v270 = vpop.permute.xlu0 %269
    %v272 = vmul.f32 %v261, %v270
    %274 = vrot.lane.b32.xlu0 %v272, 32
    %v275 = vpop.permute.xlu0 %274
    %v277 = vadd.f32 %v267, %v275
    %v278 = vtanh.pop %v277
    %280 = vrot.lane.b32.xlu0 %v278, 32
    %v281 = vpop.permute.xlu0 %280
    %v283 = vmul.f32 %v261, %v281
    %285 = vrot.lane.b32.xlu0 %v283, 64
    %v286 = vpop.permute.xlu0 %285
    %288 = vst.msk [vmem:[#allocation11] sm:$0xff] %vm113, %v286
    %s289 = scalar_lea.vmem [#allocation2], 8
    %v290 = vld [vmem:[%s289] sm:$0xff]
    %v291 = vld [vmem:[#allocation10] sm:$0xff]
    %v292 = vld [vmem:[#allocation10 + $0x8] sm:$0xff]
    %v293 = vld [vmem:[#allocation10 + $0x10] sm:$0xff]
    %v294 = vld [vmem:[#allocation10 + $0x18] sm:$0xff]
    %295 = vmatpush.msra.mxu0 0.0
    %296 = vmatpush.msra.mxu0 0.0
    %297 = vmatpush.msra.mxu0 0.0
    %298 = vmatpush.msra.mxu0 0.0
    %299 = vmatpush.msra.mxu0 0.0
    %300 = vmatpush.msra.mxu0 0.0
    %301 = vmatpush.msra.mxu0 0.0
    %302 = vmatpush.msra.mxu0 0.0
    %303 = vmatpush.msra.mxu0 0.0
    %304 = vmatpush.msra.mxu0 0.0
    %305 = vmatpush.msra.mxu0 0.0
    %306 = vmatpush.msra.mxu0 0.0
    %307 = vmatpush.msra.mxu0 %v294
    %308 = vmatpush.msra.mxu0 %v293
    %309 = vmatpush.msra.mxu0 %v292
    %310 = vmatpush.msra.mxu0 %v291
    %311 = vmatmul.f32.gmra.mxu0 %v215
    %v312 = vpop.f32.mrf.mxu0
    %v313 = vadd.f32 0.0, %v312
    %314 = vdwg.mxu0
    %v315 = vadd.f32 %v290, %v313
    %v316 = vxor.u32 %v315, 2147483648
    %v317 = vmul.f32 %v316, 1.442695
    %v318 = vpow.pop %v317
    %v319 = vadd.f32 %v318, 1.0
    %v320 = vrcp.pop %v319
    %v321 = vmul.f32 %v319, %v320
    %v322 = vsub.f32 1.0, %v321
    %v323 = vmul.f32 %v320, %v322
    %v324 = vadd.f32 %v320, %v323
    %vm325 = vweird.f32 %v319
    %vm326 = vweird.f32 %v320
    %vm327 = vmor %vm325, %vm326
    %v328 = vsel %vm327, %v320, %v324
    %v329 = vand.u32 2147483647, %v319
    %vm330 = vcmp.eq.f32.partialorder %v329, 8.507059e+37
    %v331 = vand.u32 %v319, 2147483648
    %v332 = vor.u32 1.1754944e-38, %v331
    %v333 = vsel %vm330, %v332, %v328
    %v334 = vmul.f32 1.0, %v333
    %v335 = vtanh.pop %v315
    %v336 = vmul.f32 %v334, %v172
    %338 = vrot.lane.b32.xlu0 %v335, 32
    %v339 = vpop.permute.xlu0 %338
    %v341 = vmul.f32 %v334, %v339
    %343 = vrot.lane.b32.xlu0 %v341, 32
    %v344 = vpop.permute.xlu0 %343
    %v346 = vadd.f32 %v336, %v344
    %v347 = vtanh.pop %v346
    %349 = vrot.lane.b32.xlu0 %v347, 32
    %v350 = vpop.permute.xlu0 %349
    %v352 = vmul.f32 %v334, %v350
    %v353 = vld [vmem:[%s179] sm:$0xff]
    %v354 = vld [vmem:[%s179 + $0x8] sm:$0xff]
    %v355 = vld [vmem:[%s179 + $0x10] sm:$0xff]
    %v356 = vld [vmem:[%s179 + $0x18] sm:$0xff]
    %v357 = vld [vmem:[%s184] sm:$0xff]
    %v358 = vld [vmem:[%s184 + $0x8] sm:$0xff]
    %v359 = vld [vmem:[%s184 + $0x10] sm:$0xff]
    %v360 = vld [vmem:[%s184 + $0x18] sm:$0xff]
    %v361 = vsel %vm113, %v286, 0
    %363 = vmatpush.msra.mxu0 0.0
    %364 = vmatpush.msra.mxu0 0.0
    %365 = vmatpush.msra.mxu0 0.0
    %366 = vmatpush.msra.mxu0 0.0
    %367 = vmatpush.msra.mxu0 0.0
    %368 = vmatpush.msra.mxu0 0.0
    %369 = vmatpush.msra.mxu0 0.0
    %370 = vmatpush.msra.mxu0 0.0
    %371 = vmatpush.msra.mxu0 0.0
    %372 = vmatpush.msra.mxu0 0.0
    %373 = vmatpush.msra.mxu0 0.0
    %374 = vmatpush.msra.mxu0 0.0
    %375 = vmatpush.msra.mxu0 %v360
    %376 = vmatpush.msra.mxu0 %v359
    %377 = vmatpush.msra.mxu0 %v358
    %378 = vmatpush.msra.mxu0 %v357
    %379 = vmatmul.f32.gmra.mxu0 %v361
    %v380 = vpop.f32.mrf.mxu0
    %v381 = vadd.f32 0.0, %v380
    %382 = vdwg.mxu0
    %384 = vrot.lane.b32.xlu0 %v352, 64
    %v385 = vpop.permute.xlu0 %384
    %v386 = vsel %vm113, %v385, 0
    %388 = vmatpush.msra.mxu0 0.0
    %389 = vmatpush.msra.mxu0 0.0
    %390 = vmatpush.msra.mxu0 0.0
    %391 = vmatpush.msra.mxu0 0.0
    %392 = vmatpush.msra.mxu0 0.0
    %393 = vmatpush.msra.mxu0 0.0
    %394 = vmatpush.msra.mxu0 0.0
    %395 = vmatpush.msra.mxu0 0.0
    %396 = vmatpush.msra.mxu0 0.0
    %397 = vmatpush.msra.mxu0 0.0
    %398 = vmatpush.msra.mxu0 0.0
    %399 = vmatpush.msra.mxu0 0.0
    %400 = vmatpush.msra.mxu0 %v356
    %401 = vmatpush.msra.mxu0 %v355
    %402 = vmatpush.msra.mxu0 %v354
    %403 = vmatpush.msra.mxu0 %v353
    %404 = vmatmul.f32.gmra.mxu0 %v386
    %v405 = vpop.f32.mrf.mxu0
    %v406 = vadd.f32 %v381, %v405
    %407 = vdwg.mxu0
    %v408 = vld [vmem:[%s237] sm:$0x1]
    %v410 = vperm.slane %v408, 0
    %v412 = vadd.f32 %v406, %v410
    %v413 = vxor.u32 %v412, 2147483648
    %v414 = vmul.f32 %v413, 1.442695
    %v415 = vpow.pop %v414
    %v416 = vadd.f32 %v415, 1.0
    %v417 = vrcp.pop %v416
    %v418 = vmul.f32 %v416, %v417
    %v419 = vsub.f32 1.0, %v418
    %v420 = vmul.f32 %v417, %v419
    %v421 = vadd.f32 %v417, %v420
    %vm422 = vweird.f32 %v416
    %vm423 = vweird.f32 %v417
    %vm424 = vmor %vm422, %vm423
    %v425 = vsel %vm424, %v417, %v421
    %v426 = vand.u32 2147483647, %v416
    %vm427 = vcmp.eq.f32.partialorder %v426, 8.507059e+37
    %v428 = vand.u32 %v416, 2147483648
    %v429 = vor.u32 1.1754944e-38, %v428
    %v430 = vsel %vm427, %v429, %v425
    %v431 = vmul.f32 1.0, %v430
    %v432 = vtanh.pop %v412
    %v433 = vmul.f32 %v431, %v277
    %435 = vrot.lane.b32.xlu0 %v432, 32
    %v436 = vpop.permute.xlu0 %435
    %v438 = vmul.f32 %v431, %v436
    %440 = vrot.lane.b32.xlu0 %v438, 32
    %v441 = vpop.permute.xlu0 %440
    %v443 = vadd.f32 %v433, %v441
    %v444 = vtanh.pop %v443
    %446 = vrot.lane.b32.xlu0 %v444, 32
    %v447 = vpop.permute.xlu0 %446
    %v449 = vmul.f32 %v431, %v447
    %451 = vrot.lane.b32.xlu0 %v449, 64
    %v452 = vpop.permute.xlu0 %451
    %s454 = scalar_lea.vmem [#allocation11], 8
    %455 = vst.msk [vmem:[%s454] sm:$0xff] %vm113, %v452
    %s456 = scalar_lea.vmem [#allocation2], 16
    %v457 = vld [vmem:[%s456] sm:$0xff]
    %v458 = vld [vmem:[#allocation10] sm:$0xff]
    %v459 = vld [vmem:[#allocation10 + $0x8] sm:$0xff]
    %v460 = vld [vmem:[#allocation10 + $0x10] sm:$0xff]
    %v461 = vld [vmem:[#allocation10 + $0x18] sm:$0xff]
    %462 = vmatpush.msra.mxu0 0.0
    %463 = vmatpush.msra.mxu0 0.0
    %464 = vmatpush.msra.mxu0 0.0
    %465 = vmatpush.msra.mxu0 0.0
    %466 = vmatpush.msra.mxu0 0.0
    %467 = vmatpush.msra.mxu0 0.0
    %468 = vmatpush.msra.mxu0 0.0
    %469 = vmatpush.msra.mxu0 0.0
    %470 = vmatpush.msra.mxu0 0.0
    %471 = vmatpush.msra.mxu0 0.0
    %472 = vmatpush.msra.mxu0 0.0
    %473 = vmatpush.msra.mxu0 0.0
    %474 = vmatpush.msra.mxu0 %v461
    %475 = vmatpush.msra.mxu0 %v460
    %476 = vmatpush.msra.mxu0 %v459
    %477 = vmatpush.msra.mxu0 %v458
    %478 = vmatmul.f32.gmra.mxu0 %v386
    %v479 = vpop.f32.mrf.mxu0
    %v480 = vadd.f32 0.0, %v479
    %481 = vdwg.mxu0
    %v482 = vadd.f32 %v457, %v480
    %v483 = vxor.u32 %v482, 2147483648
    %v484 = vmul.f32 %v483, 1.442695
    %v485 = vpow.pop %v484
    %v486 = vadd.f32 %v485, 1.0
    %v487 = vrcp.pop %v486
    %v488 = vmul.f32 %v486, %v487
    %v489 = vsub.f32 1.0, %v488
    %v490 = vmul.f32 %v487, %v489
    %v491 = vadd.f32 %v487, %v490
    %vm492 = vweird.f32 %v486
    %vm493 = vweird.f32 %v487
    %vm494 = vmor %vm492, %vm493
    %v495 = vsel %vm494, %v487, %v491
    %v496 = vand.u32 2147483647, %v486
    %vm497 = vcmp.eq.f32.partialorder %v496, 8.507059e+37
    %v498 = vand.u32 %v486, 2147483648
    %v499 = vor.u32 1.1754944e-38, %v498
    %v500 = vsel %vm497, %v499, %v495
    %v501 = vmul.f32 1.0, %v500
    %v502 = vtanh.pop %v482
    %v503 = vmul.f32 %v501, %v346
    %505 = vrot.lane.b32.xlu0 %v502, 32
    %v506 = vpop.permute.xlu0 %505
    %v508 = vmul.f32 %v501, %v506
    %510 = vrot.lane.b32.xlu0 %v508, 32
    %v511 = vpop.permute.xlu0 %510
    %v513 = vadd.f32 %v503, %v511
    %v514 = vtanh.pop %v513
    %516 = vrot.lane.b32.xlu0 %v514, 32
    %v517 = vpop.permute.xlu0 %516
    %v519 = vmul.f32 %v501, %v517
    %v520 = vld [vmem:[%s179] sm:$0xff]
    %v521 = vld [vmem:[%s179 + $0x8] sm:$0xff]
    %v522 = vld [vmem:[%s179 + $0x10] sm:$0xff]
    %v523 = vld [vmem:[%s179 + $0x18] sm:$0xff]
    %v524 = vld [vmem:[%s184] sm:$0xff]
    %v525 = vld [vmem:[%s184 + $0x8] sm:$0xff]
    %v526 = vld [vmem:[%s184 + $0x10] sm:$0xff]
    %v527 = vld [vmem:[%s184 + $0x18] sm:$0xff]
    %v528 = vsel %vm113, %v452, 0
    %530 = vmatpush.msra.mxu0 0.0
    %531 = vmatpush.msra.mxu0 0.0
    %532 = vmatpush.msra.mxu0 0.0
    %533 = vmatpush.msra.mxu0 0.0
    %534 = vmatpush.msra.mxu0 0.0
    %535 = vmatpush.msra.mxu0 0.0
    %536 = vmatpush.msra.mxu0 0.0
    %537 = vmatpush.msra.mxu0 0.0
    %538 = vmatpush.msra.mxu0 0.0
    %539 = vmatpush.msra.mxu0 0.0
    %540 = vmatpush.msra.mxu0 0.0
    %541 = vmatpush.msra.mxu0 0.0
    %542 = vmatpush.msra.mxu0 %v527
    %543 = vmatpush.msra.mxu0 %v526
    %544 = vmatpush.msra.mxu0 %v525
    %545 = vmatpush.msra.mxu0 %v524
    %546 = vmatmul.f32.gmra.mxu0 %v528
    %v547 = vpop.f32.mrf.mxu0
    %v548 = vadd.f32 0.0, %v547
    %549 = vdwg.mxu0
    %551 = vrot.lane.b32.xlu0 %v519, 64
    %v552 = vpop.permute.xlu0 %551
    %v553 = vsel %vm113, %v552, 0
    %555 = vmatpush.msra.mxu0 0.0
    %556 = vmatpush.msra.mxu0 0.0
    %557 = vmatpush.msra.mxu0 0.0
    %558 = vmatpush.msra.mxu0 0.0
    %559 = vmatpush.msra.mxu0 0.0
    %560 = vmatpush.msra.mxu0 0.0
    %561 = vmatpush.msra.mxu0 0.0
    %562 = vmatpush.msra.mxu0 0.0
    %563 = vmatpush.msra.mxu0 0.0
    %564 = vmatpush.msra.mxu0 0.0
    %565 = vmatpush.msra.mxu0 0.0
    %566 = vmatpush.msra.mxu0 0.0
    %567 = vmatpush.msra.mxu0 %v523
    %568 = vmatpush.msra.mxu0 %v522
    %569 = vmatpush.msra.mxu0 %v521
    %570 = vmatpush.msra.mxu0 %v520
    %571 = vmatmul.f32.gmra.mxu0 %v553
    %v572 = vpop.f32.mrf.mxu0
    %v573 = vadd.f32 %v548, %v572
    %574 = vdwg.mxu0
    %v575 = vld [vmem:[%s237] sm:$0x1]
    %v577 = vperm.slane %v575, 0
    %v579 = vadd.f32 %v573, %v577
    %v580 = vxor.u32 %v579, 2147483648
    %v581 = vmul.f32 %v580, 1.442695
    %v582 = vpow.pop %v581
    %v583 = vadd.f32 %v582, 1.0
    %v584 = vrcp.pop %v583
    %v585 = vmul.f32 %v583, %v584
    %v586 = vsub.f32 1.0, %v585
    %v587 = vmul.f32 %v584, %v586
    %v588 = vadd.f32 %v584, %v587
    %vm589 = vweird.f32 %v583
    %vm590 = vweird.f32 %v584
    %vm591 = vmor %vm589, %vm590
    %v592 = vsel %vm591, %v584, %v588
    %v593 = vand.u32 2147483647, %v583
    %vm594 = vcmp.eq.f32.partialorder %v593, 8.507059e+37
    %v595 = vand.u32 %v583, 2147483648
    %v596 = vor.u32 1.1754944e-38, %v595
    %v597 = vsel %vm594, %v596, %v592
    %v598 = vmul.f32 1.0, %v597
    %v599 = vtanh.pop %v579
    %v600 = vmul.f32 %v598, %v443
    %602 = vrot.lane.b32.xlu0 %v599, 32
    %v603 = vpop.permute.xlu0 %602
    %v605 = vmul.f32 %v598, %v603
    %607 = vrot.lane.b32.xlu0 %v605, 32
    %v608 = vpop.permute.xlu0 %607
    %v610 = vadd.f32 %v600, %v608
    %v611 = vtanh.pop %v610
    %613 = vrot.lane.b32.xlu0 %v611, 32
    %v614 = vpop.permute.xlu0 %613
    %v616 = vmul.f32 %v598, %v614
    %618 = vrot.lane.b32.xlu0 %v616, 64
    %v619 = vpop.permute.xlu0 %618
    %s621 = scalar_lea.vmem [#allocation11], 16
    %622 = vst.msk [vmem:[%s621] sm:$0xff] %vm113, %v619
    %s623 = scalar_lea.vmem [#allocation2], 24
    %v624 = vld [vmem:[%s623] sm:$0xff]
    %v625 = vld [vmem:[#allocation10] sm:$0xff]
    %v626 = vld [vmem:[#allocation10 + $0x8] sm:$0xff]
    %v627 = vld [vmem:[#allocation10 + $0x10] sm:$0xff]
    %v628 = vld [vmem:[#allocation10 + $0x18] sm:$0xff]
    %629 = vmatpush.msra.mxu0 0.0
    %630 = vmatpush.msra.mxu0 0.0
    %631 = vmatpush.msra.mxu0 0.0
    %632 = vmatpush.msra.mxu0 0.0
    %633 = vmatpush.msra.mxu0 0.0
    %634 = vmatpush.msra.mxu0 0.0
    %635 = vmatpush.msra.mxu0 0.0
    %636 = vmatpush.msra.mxu0 0.0
    %637 = vmatpush.msra.mxu0 0.0
    %638 = vmatpush.msra.mxu0 0.0
    %639 = vmatpush.msra.mxu0 0.0
    %640 = vmatpush.msra.mxu0 0.0
    %641 = vmatpush.msra.mxu0 %v628
    %642 = vmatpush.msra.mxu0 %v627
    %643 = vmatpush.msra.mxu0 %v626
    %644 = vmatpush.msra.mxu0 %v625
    %645 = vmatmul.f32.gmra.mxu0 %v553
    %v646 = vpop.f32.mrf.mxu0
    %v647 = vadd.f32 0.0, %v646
    %648 = vdwg.mxu0
    %v649 = vadd.f32 %v624, %v647
    %v650 = vxor.u32 %v649, 2147483648
    %v651 = vmul.f32 %v650, 1.442695
    %v652 = vpow.pop %v651
    %v653 = vadd.f32 %v652, 1.0
    %v654 = vrcp.pop %v653
    %v655 = vmul.f32 %v653, %v654
    %v656 = vsub.f32 1.0, %v655
    %v657 = vmul.f32 %v654, %v656
    %v658 = vadd.f32 %v654, %v657
    %vm659 = vweird.f32 %v653
    %vm660 = vweird.f32 %v654
    %vm661 = vmor %vm659, %vm660
    %v662 = vsel %vm661, %v654, %v658
    %v663 = vand.u32 2147483647, %v653
    %vm664 = vcmp.eq.f32.partialorder %v663, 8.507059e+37
    %v665 = vand.u32 %v653, 2147483648
    %v666 = vor.u32 1.1754944e-38, %v665
    %v667 = vsel %vm664, %v666, %v662
    %v668 = vmul.f32 1.0, %v667
    %v669 = vtanh.pop %v649
    %v670 = vmul.f32 %v668, %v513
    %672 = vrot.lane.b32.xlu0 %v669, 32
    %v673 = vpop.permute.xlu0 %672
    %v675 = vmul.f32 %v668, %v673
    %677 = vrot.lane.b32.xlu0 %v675, 32
    %v678 = vpop.permute.xlu0 %677
    %v680 = vadd.f32 %v670, %v678
    %v681 = vtanh.pop %v680
    %683 = vrot.lane.b32.xlu0 %v681, 32
    %v684 = vpop.permute.xlu0 %683
    %v686 = vmul.f32 %v668, %v684
    %v687 = vld [vmem:[%s179] sm:$0xff]
    %v688 = vld [vmem:[%s179 + $0x8] sm:$0xff]
    %v689 = vld [vmem:[%s179 + $0x10] sm:$0xff]
    %v690 = vld [vmem:[%s179 + $0x18] sm:$0xff]
    %v691 = vld [vmem:[%s184] sm:$0xff]
    %v692 = vld [vmem:[%s184 + $0x8] sm:$0xff]
    %v693 = vld [vmem:[%s184 + $0x10] sm:$0xff]
    %v694 = vld [vmem:[%s184 + $0x18] sm:$0xff]
    %v695 = vsel %vm113, %v619, 0
    %697 = vmatpush.msra.mxu0 0.0
    %698 = vmatpush.msra.mxu0 0.0
    %699 = vmatpush.msra.mxu0 0.0
    %700 = vmatpush.msra.mxu0 0.0
    %701 = vmatpush.msra.mxu0 0.0
    %702 = vmatpush.msra.mxu0 0.0
    %703 = vmatpush.msra.mxu0 0.0
    %704 = vmatpush.msra.mxu0 0.0
    %705 = vmatpush.msra.mxu0 0.0
    %706 = vmatpush.msra.mxu0 0.0
    %707 = vmatpush.msra.mxu0 0.0
    %708 = vmatpush.msra.mxu0 0.0
    %709 = vmatpush.msra.mxu0 %v694
    %710 = vmatpush.msra.mxu0 %v693
    %711 = vmatpush.msra.mxu0 %v692
    %712 = vmatpush.msra.mxu0 %v691
    %713 = vmatmul.f32.gmra.mxu0 %v695
    %v714 = vpop.f32.mrf.mxu0
    %v715 = vadd.f32 0.0, %v714
    %716 = vdwg.mxu0
    %718 = vrot.lane.b32.xlu0 %v686, 64
    %v719 = vpop.permute.xlu0 %718
    %v720 = vsel %vm113, %v719, 0
    %722 = vmatpush.msra.mxu0 0.0
    %723 = vmatpush.msra.mxu0 0.0
    %724 = vmatpush.msra.mxu0 0.0
    %725 = vmatpush.msra.mxu0 0.0
    %726 = vmatpush.msra.mxu0 0.0
    %727 = vmatpush.msra.mxu0 0.0
    %728 = vmatpush.msra.mxu0 0.0
    %729 = vmatpush.msra.mxu0 0.0
    %730 = vmatpush.msra.mxu0 0.0
    %731 = vmatpush.msra.mxu0 0.0
    %732 = vmatpush.msra.mxu0 0.0
    %733 = vmatpush.msra.mxu0 0.0
    %734 = vmatpush.msra.mxu0 %v690
    %735 = vmatpush.msra.mxu0 %v689
    %736 = vmatpush.msra.mxu0 %v688
    %737 = vmatpush.msra.mxu0 %v687
    %738 = vmatmul.f32.gmra.mxu0 %v720
    %v739 = vpop.f32.mrf.mxu0
    %v740 = vadd.f32 %v715, %v739
    %741 = vdwg.mxu0
    %v742 = vld [vmem:[%s237] sm:$0x1]
    %v744 = vperm.slane %v742, 0
    %v746 = vadd.f32 %v740, %v744
    %v747 = vxor.u32 %v746, 2147483648
    %v748 = vmul.f32 %v747, 1.442695
    %v749 = vpow.pop %v748
    %v750 = vadd.f32 %v749, 1.0
    %v751 = vrcp.pop %v750
    %v752 = vmul.f32 %v750, %v751
    %v753 = vsub.f32 1.0, %v752
    %v754 = vmul.f32 %v751, %v753
    %v755 = vadd.f32 %v751, %v754
    %vm756 = vweird.f32 %v750
    %vm757 = vweird.f32 %v751
    %vm758 = vmor %vm756, %vm757
    %v759 = vsel %vm758, %v751, %v755
    %v760 = vand.u32 2147483647, %v750
    %vm761 = vcmp.eq.f32.partialorder %v760, 8.507059e+37
    %v762 = vand.u32 %v750, 2147483648
    %v763 = vor.u32 1.1754944e-38, %v762
    %v764 = vsel %vm761, %v763, %v759
    %v765 = vmul.f32 1.0, %v764
    %v766 = vtanh.pop %v746
    %v767 = vmul.f32 %v765, %v610
    %769 = vrot.lane.b32.xlu0 %v766, 32
    %v770 = vpop.permute.xlu0 %769
    %v772 = vmul.f32 %v765, %v770
    %774 = vrot.lane.b32.xlu0 %v772, 32
    %v775 = vpop.permute.xlu0 %774
    %v777 = vadd.f32 %v767, %v775
    %v778 = vtanh.pop %v777
    %780 = vrot.lane.b32.xlu0 %v778, 32
    %v781 = vpop.permute.xlu0 %780
    %v783 = vmul.f32 %v765, %v781
    %785 = vrot.lane.b32.xlu0 %v783, 64
    %v786 = vpop.permute.xlu0 %785
    %s788 = scalar_lea.vmem [#allocation11], 24
    %789 = vst.msk [vmem:[%s788] sm:$0xff] %vm113, %v786
    %s790 = scalar_lea.vmem [#allocation2], 32
    %v791 = vld [vmem:[%s790] sm:$0xff]
    %v792 = vld [vmem:[#allocation10] sm:$0xff]
    %v793 = vld [vmem:[#allocation10 + $0x8] sm:$0xff]
    %v794 = vld [vmem:[#allocation10 + $0x10] sm:$0xff]
    %v795 = vld [vmem:[#allocation10 + $0x18] sm:$0xff]
    %796 = vmatpush.msra.mxu0 0.0
    %797 = vmatpush.msra.mxu0 0.0
    %798 = vmatpush.msra.mxu0 0.0
    %799 = vmatpush.msra.mxu0 0.0
    %800 = vmatpush.msra.mxu0 0.0
    %801 = vmatpush.msra.mxu0 0.0
    %802 = vmatpush.msra.mxu0 0.0
    %803 = vmatpush.msra.mxu0 0.0
    %804 = vmatpush.msra.mxu0 0.0
    %805 = vmatpush.msra.mxu0 0.0
    %806 = vmatpush.msra.mxu0 0.0
    %807 = vmatpush.msra.mxu0 0.0
    %808 = vmatpush.msra.mxu0 %v795
    %809 = vmatpush.msra.mxu0 %v794
    %810 = vmatpush.msra.mxu0 %v793
    %811 = vmatpush.msra.mxu0 %v792
    %812 = vmatmul.f32.gmra.mxu0 %v720
    %v813 = vpop.f32.mrf.mxu0
    %v814 = vadd.f32 0.0, %v813
    %815 = vdwg.mxu0
    %v816 = vadd.f32 %v791, %v814
    %v817 = vxor.u32 %v816, 2147483648
    %v818 = vmul.f32 %v817, 1.442695
    %v819 = vpow.pop %v818
    %v820 = vadd.f32 %v819, 1.0
    %v821 = vrcp.pop %v820
    %v822 = vmul.f32 %v820, %v821
    %v823 = vsub.f32 1.0, %v822
    %v824 = vmul.f32 %v821, %v823
    %v825 = vadd.f32 %v821, %v824
    %vm826 = vweird.f32 %v820
    %vm827 = vweird.f32 %v821
    %vm828 = vmor %vm826, %vm827
    %v829 = vsel %vm828, %v821, %v825
    %v830 = vand.u32 2147483647, %v820
    %vm831 = vcmp.eq.f32.partialorder %v830, 8.507059e+37
    %v832 = vand.u32 %v820, 2147483648
    %v833 = vor.u32 1.1754944e-38, %v832
    %v834 = vsel %vm831, %v833, %v829
    %v835 = vmul.f32 1.0, %v834
    %v836 = vtanh.pop %v816
    %v837 = vmul.f32 %v835, %v680
    %839 = vrot.lane.b32.xlu0 %v836, 32
    %v840 = vpop.permute.xlu0 %839
    %v842 = vmul.f32 %v835, %v840
    %844 = vrot.lane.b32.xlu0 %v842, 32
    %v845 = vpop.permute.xlu0 %844
    %v847 = vadd.f32 %v837, %v845
    %v848 = vtanh.pop %v847
    %850 = vrot.lane.b32.xlu0 %v848, 32
    %v851 = vpop.permute.xlu0 %850
    %v853 = vmul.f32 %v835, %v851
    %v854 = vld [vmem:[%s179] sm:$0xff]
    %v855 = vld [vmem:[%s179 + $0x8] sm:$0xff]
    %v856 = vld [vmem:[%s179 + $0x10] sm:$0xff]
    %v857 = vld [vmem:[%s179 + $0x18] sm:$0xff]
    %v858 = vld [vmem:[%s184] sm:$0xff]
    %v859 = vld [vmem:[%s184 + $0x8] sm:$0xff]
    %v860 = vld [vmem:[%s184 + $0x10] sm:$0xff]
    %v861 = vld [vmem:[%s184 + $0x18] sm:$0xff]
    %v862 = vsel %vm113, %v786, 0
    %864 = vmatpush.msra.mxu0 0.0
    %865 = vmatpush.msra.mxu0 0.0
    %866 = vmatpush.msra.mxu0 0.0
    %867 = vmatpush.msra.mxu0 0.0
    %868 = vmatpush.msra.mxu0 0.0
    %869 = vmatpush.msra.mxu0 0.0
    %870 = vmatpush.msra.mxu0 0.0
    %871 = vmatpush.msra.mxu0 0.0
    %872 = vmatpush.msra.mxu0 0.0
    %873 = vmatpush.msra.mxu0 0.0
    %874 = vmatpush.msra.mxu0 0.0
    %875 = vmatpush.msra.mxu0 0.0
    %876 = vmatpush.msra.mxu0 %v861
    %877 = vmatpush.msra.mxu0 %v860
    %878 = vmatpush.msra.mxu0 %v859
    %879 = vmatpush.msra.mxu0 %v858
    %880 = vmatmul.f32.gmra.mxu0 %v862
    %v881 = vpop.f32.mrf.mxu0
    %v882 = vadd.f32 0.0, %v881
    %883 = vdwg.mxu0
    %885 = vrot.lane.b32.xlu0 %v853, 64
    %v886 = vpop.permute.xlu0 %885
    %v887 = vsel %vm113, %v886, 0
    %889 = vmatpush.msra.mxu0 0.0
    %890 = vmatpush.msra.mxu0 0.0
    %891 = vmatpush.msra.mxu0 0.0
    %892 = vmatpush.msra.mxu0 0.0
    %893 = vmatpush.msra.mxu0 0.0
    %894 = vmatpush.msra.mxu0 0.0
    %895 = vmatpush.msra.mxu0 0.0
    %896 = vmatpush.msra.mxu0 0.0
    %897 = vmatpush.msra.mxu0 0.0
    %898 = vmatpush.msra.mxu0 0.0
    %899 = vmatpush.msra.mxu0 0.0
    %900 = vmatpush.msra.mxu0 0.0
    %901 = vmatpush.msra.mxu0 %v857
    %902 = vmatpush.msra.mxu0 %v856
    %903 = vmatpush.msra.mxu0 %v855
    %904 = vmatpush.msra.mxu0 %v854
    %905 = vmatmul.f32.gmra.mxu0 %v887
    %v906 = vpop.f32.mrf.mxu0
    %v907 = vadd.f32 %v882, %v906
    %908 = vdwg.mxu0
    %v909 = vld [vmem:[%s237] sm:$0x1]
    %v911 = vperm.slane %v909, 0
    %v913 = vadd.f32 %v907, %v911
    %v914 = vxor.u32 %v913, 2147483648
    %v915 = vmul.f32 %v914, 1.442695
    %v916 = vpow.pop %v915
    %v917 = vadd.f32 %v916, 1.0
    %v918 = vrcp.pop %v917
    %v919 = vmul.f32 %v917, %v918
    %v920 = vsub.f32 1.0, %v919
    %v921 = vmul.f32 %v918, %v920
    %v922 = vadd.f32 %v918, %v921
    %vm923 = vweird.f32 %v917
    %vm924 = vweird.f32 %v918
    %vm925 = vmor %vm923, %vm924
    %v926 = vsel %vm925, %v918, %v922
    %v927 = vand.u32 2147483647, %v917
    %vm928 = vcmp.eq.f32.partialorder %v927, 8.507059e+37
    %v929 = vand.u32 %v917, 2147483648
    %v930 = vor.u32 1.1754944e-38, %v929
    %v931 = vsel %vm928, %v930, %v926
    %v932 = vmul.f32 1.0, %v931
    %v933 = vtanh.pop %v913
    %v934 = vmul.f32 %v932, %v777
    %936 = vrot.lane.b32.xlu0 %v933, 32
    %v937 = vpop.permute.xlu0 %936
    %v939 = vmul.f32 %v932, %v937
    %941 = vrot.lane.b32.xlu0 %v939, 32
    %v942 = vpop.permute.xlu0 %941
    %v944 = vadd.f32 %v934, %v942
    %v945 = vtanh.pop %v944
    %947 = vrot.lane.b32.xlu0 %v945, 32
    %v948 = vpop.permute.xlu0 %947
    %v950 = vmul.f32 %v932, %v948
    %952 = vrot.lane.b32.xlu0 %v950, 64
    %v953 = vpop.permute.xlu0 %952
    %s955 = scalar_lea.vmem [#allocation11], 32
    %956 = vst.msk [vmem:[%s955] sm:$0xff] %vm113, %v953
    %s957 = scalar_lea.vmem [#allocation2], 40
    %v958 = vld [vmem:[%s957] sm:$0xff]
    %v959 = vld [vmem:[#allocation10] sm:$0xff]
    %v960 = vld [vmem:[#allocation10 + $0x8] sm:$0xff]
    %v961 = vld [vmem:[#allocation10 + $0x10] sm:$0xff]
    %v962 = vld [vmem:[#allocation10 + $0x18] sm:$0xff]
    %963 = vmatpush.msra.mxu0 0.0
    %964 = vmatpush.msra.mxu0 0.0
    %965 = vmatpush.msra.mxu0 0.0
    %966 = vmatpush.msra.mxu0 0.0
    %967 = vmatpush.msra.mxu0 0.0
    %968 = vmatpush.msra.mxu0 0.0
    %969 = vmatpush.msra.mxu0 0.0
    %970 = vmatpush.msra.mxu0 0.0
    %971 = vmatpush.msra.mxu0 0.0
    %972 = vmatpush.msra.mxu0 0.0
    %973 = vmatpush.msra.mxu0 0.0
    %974 = vmatpush.msra.mxu0 0.0
    %975 = vmatpush.msra.mxu0 %v962
    %976 = vmatpush.msra.mxu0 %v961
    %977 = vmatpush.msra.mxu0 %v960
    %978 = vmatpush.msra.mxu0 %v959
    %979 = vmatmul.f32.gmra.mxu0 %v887
    %v980 = vpop.f32.mrf.mxu0
    %v981 = vadd.f32 0.0, %v980
    %982 = vdwg.mxu0
    %v983 = vadd.f32 %v958, %v981
    %v984 = vxor.u32 %v983, 2147483648
    %v985 = vmul.f32 %v984, 1.442695
    %v986 = vpow.pop %v985
    %v987 = vadd.f32 %v986, 1.0
    %v988 = vrcp.pop %v987
    %v989 = vmul.f32 %v987, %v988
    %v990 = vsub.f32 1.0, %v989
    %v991 = vmul.f32 %v988, %v990
    %v992 = vadd.f32 %v988, %v991
    %vm993 = vweird.f32 %v987
    %vm994 = vweird.f32 %v988
    %vm995 = vmor %vm993, %vm994
    %v996 = vsel %vm995, %v988, %v992
    %v997 = vand.u32 2147483647, %v987
    %vm998 = vcmp.eq.f32.partialorder %v997, 8.507059e+37
    %v999 = vand.u32 %v987, 2147483648
    %v1000 = vor.u32 1.1754944e-38, %v999
    %v1001 = vsel %vm998, %v1000, %v996
    %v1002 = vmul.f32 1.0, %v1001
    %v1003 = vtanh.pop %v983
    %v1004 = vmul.f32 %v1002, %v847
    %1006 = vrot.lane.b32.xlu0 %v1003, 32
    %v1007 = vpop.permute.xlu0 %1006
    %v1009 = vmul.f32 %v1002, %v1007
    %1011 = vrot.lane.b32.xlu0 %v1009, 32
    %v1012 = vpop.permute.xlu0 %1011
    %v1014 = vadd.f32 %v1004, %v1012
    %v1015 = vtanh.pop %v1014
    %1017 = vrot.lane.b32.xlu0 %v1015, 32
    %v1018 = vpop.permute.xlu0 %1017
    %v1020 = vmul.f32 %v1002, %v1018
    %v1021 = vld [vmem:[%s179] sm:$0xff]
    %v1022 = vld [vmem:[%s179 + $0x8] sm:$0xff]
    %v1023 = vld [vmem:[%s179 + $0x10] sm:$0xff]
    %v1024 = vld [vmem:[%s179 + $0x18] sm:$0xff]
    %v1025 = vld [vmem:[%s184] sm:$0xff]
    %v1026 = vld [vmem:[%s184 + $0x8] sm:$0xff]
    %v1027 = vld [vmem:[%s184 + $0x10] sm:$0xff]
    %v1028 = vld [vmem:[%s184 + $0x18] sm:$0xff]
    %v1029 = vsel %vm113, %v953, 0
    %1031 = vmatpush.msra.mxu0 0.0
    %1032 = vmatpush.msra.mxu0 0.0
    %1033 = vmatpush.msra.mxu0 0.0
    %1034 = vmatpush.msra.mxu0 0.0
    %1035 = vmatpush.msra.mxu0 0.0
    %1036 = vmatpush.msra.mxu0 0.0
    %1037 = vmatpush.msra.mxu0 0.0
    %1038 = vmatpush.msra.mxu0 0.0
    %1039 = vmatpush.msra.mxu0 0.0
    %1040 = vmatpush.msra.mxu0 0.0
    %1041 = vmatpush.msra.mxu0 0.0
    %1042 = vmatpush.msra.mxu0 0.0
    %1043 = vmatpush.msra.mxu0 %v1028
    %1044 = vmatpush.msra.mxu0 %v1027
    %1045 = vmatpush.msra.mxu0 %v1026
    %1046 = vmatpush.msra.mxu0 %v1025
    %1047 = vmatmul.f32.gmra.mxu0 %v1029
    %v1048 = vpop.f32.mrf.mxu0
    %v1049 = vadd.f32 0.0, %v1048
    %1050 = vdwg.mxu0
    %1052 = vrot.lane.b32.xlu0 %v1020, 64
    %v1053 = vpop.permute.xlu0 %1052
    %v1054 = vsel %vm113, %v1053, 0
    %1056 = vmatpush.msra.mxu0 0.0
    %1057 = vmatpush.msra.mxu0 0.0
    %1058 = vmatpush.msra.mxu0 0.0
    %1059 = vmatpush.msra.mxu0 0.0
    %1060 = vmatpush.msra.mxu0 0.0
    %1061 = vmatpush.msra.mxu0 0.0
    %1062 = vmatpush.msra.mxu0 0.0
    %1063 = vmatpush.msra.mxu0 0.0
    %1064 = vmatpush.msra.mxu0 0.0
    %1065 = vmatpush.msra.mxu0 0.0
    %1066 = vmatpush.msra.mxu0 0.0
    %1067 = vmatpush.msra.mxu0 0.0
    %1068 = vmatpush.msra.mxu0 %v1024
    %1069 = vmatpush.msra.mxu0 %v1023
    %1070 = vmatpush.msra.mxu0 %v1022
    %1071 = vmatpush.msra.mxu0 %v1021
    %1072 = vmatmul.f32.gmra.mxu0 %v1054
    %v1073 = vpop.f32.mrf.mxu0
    %v1074 = vadd.f32 %v1049, %v1073
    %1075 = vdwg.mxu0
    %v1076 = vld [vmem:[%s237] sm:$0x1]
    %v1078 = vperm.slane %v1076, 0
    %v1080 = vadd.f32 %v1074, %v1078
    %v1081 = vxor.u32 %v1080, 2147483648
    %v1082 = vmul.f32 %v1081, 1.442695
    %v1083 = vpow.pop %v1082
    %v1084 = vadd.f32 %v1083, 1.0
    %v1085 = vrcp.pop %v1084
    %v1086 = vmul.f32 %v1084, %v1085
    %v1087 = vsub.f32 1.0, %v1086
    %v1088 = vmul.f32 %v1085, %v1087
    %v1089 = vadd.f32 %v1085, %v1088
    %vm1090 = vweird.f32 %v1084
    %vm1091 = vweird.f32 %v1085
    %vm1092 = vmor %vm1090, %vm1091
    %v1093 = vsel %vm1092, %v1085, %v1089
    %v1094 = vand.u32 2147483647, %v1084
    %vm1095 = vcmp.eq.f32.partialorder %v1094, 8.507059e+37
    %v1096 = vand.u32 %v1084, 2147483648
    %v1097 = vor.u32 1.1754944e-38, %v1096
    %v1098 = vsel %vm1095, %v1097, %v1093
    %v1099 = vmul.f32 1.0, %v1098
    %v1100 = vtanh.pop %v1080
    %v1101 = vmul.f32 %v1099, %v944
    %1103 = vrot.lane.b32.xlu0 %v1100, 32
    %v1104 = vpop.permute.xlu0 %1103
    %v1106 = vmul.f32 %v1099, %v1104
    %1108 = vrot.lane.b32.xlu0 %v1106, 32
    %v1109 = vpop.permute.xlu0 %1108
    %v1111 = vadd.f32 %v1101, %v1109
    %v1112 = vtanh.pop %v1111
    %1114 = vrot.lane.b32.xlu0 %v1112, 32
    %v1115 = vpop.permute.xlu0 %1114
    %v1117 = vmul.f32 %v1099, %v1115
    %1119 = vrot.lane.b32.xlu0 %v1117, 64
    %v1120 = vpop.permute.xlu0 %1119
    %s1122 = scalar_lea.vmem [#allocation11], 40
    %1123 = vst.msk [vmem:[%s1122] sm:$0xff] %vm113, %v1120
    %s1124 = scalar_lea.vmem [#allocation2], 48
    %v1125 = vld [vmem:[%s1124] sm:$0xff]
    %v1126 = vld [vmem:[#allocation10] sm:$0xff]
    %v1127 = vld [vmem:[#allocation10 + $0x8] sm:$0xff]
    %v1128 = vld [vmem:[#allocation10 + $0x10] sm:$0xff]
    %v1129 = vld [vmem:[#allocation10 + $0x18] sm:$0xff]
    %1130 = vmatpush.msra.mxu0 0.0
    %1131 = vmatpush.msra.mxu0 0.0
    %1132 = vmatpush.msra.mxu0 0.0
    %1133 = vmatpush.msra.mxu0 0.0
    %1134 = vmatpush.msra.mxu0 0.0
    %1135 = vmatpush.msra.mxu0 0.0
    %1136 = vmatpush.msra.mxu0 0.0
    %1137 = vmatpush.msra.mxu0 0.0
    %1138 = vmatpush.msra.mxu0 0.0
    %1139 = vmatpush.msra.mxu0 0.0
    %1140 = vmatpush.msra.mxu0 0.0
    %1141 = vmatpush.msra.mxu0 0.0
    %1142 = vmatpush.msra.mxu0 %v1129
    %1143 = vmatpush.msra.mxu0 %v1128
    %1144 = vmatpush.msra.mxu0 %v1127
    %1145 = vmatpush.msra.mxu0 %v1126
    %1146 = vmatmul.f32.gmra.mxu0 %v1054
    %v1147 = vpop.f32.mrf.mxu0
    %v1148 = vadd.f32 0.0, %v1147
    %1149 = vdwg.mxu0
    %v1150 = vadd.f32 %v1125, %v1148
    %v1151 = vxor.u32 %v1150, 2147483648
    %v1152 = vmul.f32 %v1151, 1.442695
    %v1153 = vpow.pop %v1152
    %v1154 = vadd.f32 %v1153, 1.0
    %v1155 = vrcp.pop %v1154
    %v1156 = vmul.f32 %v1154, %v1155
    %v1157 = vsub.f32 1.0, %v1156
    %v1158 = vmul.f32 %v1155, %v1157
    %v1159 = vadd.f32 %v1155, %v1158
    %vm1160 = vweird.f32 %v1154
    %vm1161 = vweird.f32 %v1155
    %vm1162 = vmor %vm1160, %vm1161
    %v1163 = vsel %vm1162, %v1155, %v1159
    %v1164 = vand.u32 2147483647, %v1154
    %vm1165 = vcmp.eq.f32.partialorder %v1164, 8.507059e+37
    %v1166 = vand.u32 %v1154, 2147483648
    %v1167 = vor.u32 1.1754944e-38, %v1166
    %v1168 = vsel %vm1165, %v1167, %v1163
    %v1169 = vmul.f32 1.0, %v1168
    %v1170 = vtanh.pop %v1150
    %v1171 = vmul.f32 %v1169, %v1014
    %1173 = vrot.lane.b32.xlu0 %v1170, 32
    %v1174 = vpop.permute.xlu0 %1173
    %v1176 = vmul.f32 %v1169, %v1174
    %1178 = vrot.lane.b32.xlu0 %v1176, 32
    %v1179 = vpop.permute.xlu0 %1178
    %v1181 = vadd.f32 %v1171, %v1179
    %v1182 = vtanh.pop %v1181
    %1184 = vrot.lane.b32.xlu0 %v1182, 32
    %v1185 = vpop.permute.xlu0 %1184
    %v1187 = vmul.f32 %v1169, %v1185
    %v1188 = vld [vmem:[%s179] sm:$0xff]
    %v1189 = vld [vmem:[%s179 + $0x8] sm:$0xff]
    %v1190 = vld [vmem:[%s179 + $0x10] sm:$0xff]
    %v1191 = vld [vmem:[%s179 + $0x18] sm:$0xff]
    %v1192 = vld [vmem:[%s184] sm:$0xff]
    %v1193 = vld [vmem:[%s184 + $0x8] sm:$0xff]
    %v1194 = vld [vmem:[%s184 + $0x10] sm:$0xff]
    %v1195 = vld [vmem:[%s184 + $0x18] sm:$0xff]
    %v1196 = vsel %vm113, %v1120, 0
    %1198 = vmatpush.msra.mxu0 0.0
    %1199 = vmatpush.msra.mxu0 0.0
    %1200 = vmatpush.msra.mxu0 0.0
    %1201 = vmatpush.msra.mxu0 0.0
    %1202 = vmatpush.msra.mxu0 0.0
    %1203 = vmatpush.msra.mxu0 0.0
    %1204 = vmatpush.msra.mxu0 0.0
    %1205 = vmatpush.msra.mxu0 0.0
    %1206 = vmatpush.msra.mxu0 0.0
    %1207 = vmatpush.msra.mxu0 0.0
    %1208 = vmatpush.msra.mxu0 0.0
    %1209 = vmatpush.msra.mxu0 0.0
    %1210 = vmatpush.msra.mxu0 %v1195
    %1211 = vmatpush.msra.mxu0 %v1194
    %1212 = vmatpush.msra.mxu0 %v1193
    %1213 = vmatpush.msra.mxu0 %v1192
    %1214 = vmatmul.f32.gmra.mxu0 %v1196
    %v1215 = vpop.f32.mrf.mxu0
    %v1216 = vadd.f32 0.0, %v1215
    %1217 = vdwg.mxu0
    %1219 = vrot.lane.b32.xlu0 %v1187, 64
    %v1220 = vpop.permute.xlu0 %1219
    %v1221 = vsel %vm113, %v1220, 0
    %1223 = vmatpush.msra.mxu0 0.0
    %1224 = vmatpush.msra.mxu0 0.0
    %1225 = vmatpush.msra.mxu0 0.0
    %1226 = vmatpush.msra.mxu0 0.0
    %1227 = vmatpush.msra.mxu0 0.0
    %1228 = vmatpush.msra.mxu0 0.0
    %1229 = vmatpush.msra.mxu0 0.0
    %1230 = vmatpush.msra.mxu0 0.0
    %1231 = vmatpush.msra.mxu0 0.0
    %1232 = vmatpush.msra.mxu0 0.0
    %1233 = vmatpush.msra.mxu0 0.0
    %1234 = vmatpush.msra.mxu0 0.0
    %1235 = vmatpush.msra.mxu0 %v1191
    %1236 = vmatpush.msra.mxu0 %v1190
    %1237 = vmatpush.msra.mxu0 %v1189
    %1238 = vmatpush.msra.mxu0 %v1188
    %1239 = vmatmul.f32.gmra.mxu0 %v1221
    %v1240 = vpop.f32.mrf.mxu0
    %v1241 = vadd.f32 %v1216, %v1240
    %1242 = vdwg.mxu0
    %v1243 = vld [vmem:[%s237] sm:$0x1]
    %v1245 = vperm.slane %v1243, 0
    %v1247 = vadd.f32 %v1241, %v1245
    %v1248 = vxor.u32 %v1247, 2147483648
    %v1249 = vmul.f32 %v1248, 1.442695
    %v1250 = vpow.pop %v1249
    %v1251 = vadd.f32 %v1250, 1.0
    %v1252 = vrcp.pop %v1251
    %v1253 = vmul.f32 %v1251, %v1252
    %v1254 = vsub.f32 1.0, %v1253
    %v1255 = vmul.f32 %v1252, %v1254
    %v1256 = vadd.f32 %v1252, %v1255
    %vm1257 = vweird.f32 %v1251
    %vm1258 = vweird.f32 %v1252
    %vm1259 = vmor %vm1257, %vm1258
    %v1260 = vsel %vm1259, %v1252, %v1256
    %v1261 = vand.u32 2147483647, %v1251
    %vm1262 = vcmp.eq.f32.partialorder %v1261, 8.507059e+37
    %v1263 = vand.u32 %v1251, 2147483648
    %v1264 = vor.u32 1.1754944e-38, %v1263
    %v1265 = vsel %vm1262, %v1264, %v1260
    %v1266 = vmul.f32 1.0, %v1265
    %v1267 = vtanh.pop %v1247
    %v1268 = vmul.f32 %v1266, %v1111
    %1270 = vrot.lane.b32.xlu0 %v1267, 32
    %v1271 = vpop.permute.xlu0 %1270
    %v1273 = vmul.f32 %v1266, %v1271
    %1275 = vrot.lane.b32.xlu0 %v1273, 32
    %v1276 = vpop.permute.xlu0 %1275
    %v1278 = vadd.f32 %v1268, %v1276
    %v1279 = vtanh.pop %v1278
    %1281 = vrot.lane.b32.xlu0 %v1279, 32
    %v1282 = vpop.permute.xlu0 %1281
    %v1284 = vmul.f32 %v1266, %v1282
    %1286 = vrot.lane.b32.xlu0 %v1284, 64
    %v1287 = vpop.permute.xlu0 %1286
    %s1289 = scalar_lea.vmem [#allocation11], 48
    %1290 = vst.msk [vmem:[%s1289] sm:$0xff] %vm113, %v1287
    %s1291 = scalar_lea.vmem [#allocation2], 56
    %v1292 = vld [vmem:[%s1291] sm:$0xff]
    %v1293 = vld [vmem:[#allocation10] sm:$0xff]
    %v1294 = vld [vmem:[#allocation10 + $0x8] sm:$0xff]
    %v1295 = vld [vmem:[#allocation10 + $0x10] sm:$0xff]
    %v1296 = vld [vmem:[#allocation10 + $0x18] sm:$0xff]
    %1297 = vmatpush.msra.mxu0 0.0
    %1298 = vmatpush.msra.mxu0 0.0
    %1299 = vmatpush.msra.mxu0 0.0
    %1300 = vmatpush.msra.mxu0 0.0
    %1301 = vmatpush.msra.mxu0 0.0
    %1302 = vmatpush.msra.mxu0 0.0
    %1303 = vmatpush.msra.mxu0 0.0
    %1304 = vmatpush.msra.mxu0 0.0
    %1305 = vmatpush.msra.mxu0 0.0
    %1306 = vmatpush.msra.mxu0 0.0
    %1307 = vmatpush.msra.mxu0 0.0
    %1308 = vmatpush.msra.mxu0 0.0
    %1309 = vmatpush.msra.mxu0 %v1296
    %1310 = vmatpush.msra.mxu0 %v1295
    %1311 = vmatpush.msra.mxu0 %v1294
    %1312 = vmatpush.msra.mxu0 %v1293
    %1313 = vmatmul.f32.gmra.mxu0 %v1221
    %v1314 = vpop.f32.mrf.mxu0
    %v1315 = vadd.f32 0.0, %v1314
    %1316 = vdwg.mxu0
    %v1317 = vadd.f32 %v1292, %v1315
    %v1318 = vxor.u32 %v1317, 2147483648
    %v1319 = vmul.f32 %v1318, 1.442695
    %v1320 = vpow.pop %v1319
    %v1321 = vadd.f32 %v1320, 1.0
    %v1322 = vrcp.pop %v1321
    %v1323 = vmul.f32 %v1321, %v1322
    %v1324 = vsub.f32 1.0, %v1323
    %v1325 = vmul.f32 %v1322, %v1324
    %v1326 = vadd.f32 %v1322, %v1325
    %vm1327 = vweird.f32 %v1321
    %vm1328 = vweird.f32 %v1322
    %vm1329 = vmor %vm1327, %vm1328
    %v1330 = vsel %vm1329, %v1322, %v1326
    %v1331 = vand.u32 2147483647, %v1321
    %vm1332 = vcmp.eq.f32.partialorder %v1331, 8.507059e+37
    %v1333 = vand.u32 %v1321, 2147483648
    %v1334 = vor.u32 1.1754944e-38, %v1333
    %v1335 = vsel %vm1332, %v1334, %v1330
    %v1336 = vmul.f32 1.0, %v1335
    %v1337 = vtanh.pop %v1317
    %v1338 = vmul.f32 %v1336, %v1181
    %1340 = vrot.lane.b32.xlu0 %v1337, 32
    %v1341 = vpop.permute.xlu0 %1340
    %v1343 = vmul.f32 %v1336, %v1341
    %1345 = vrot.lane.b32.xlu0 %v1343, 32
    %v1346 = vpop.permute.xlu0 %1345
    %v1348 = vadd.f32 %v1338, %v1346
    %v1349 = vtanh.pop %v1348
    %1351 = vrot.lane.b32.xlu0 %v1349, 32
    %v1352 = vpop.permute.xlu0 %1351
    %v1354 = vmul.f32 %v1336, %v1352
    %v1355 = vld [vmem:[%s179] sm:$0xff]
    %v1356 = vld [vmem:[%s179 + $0x8] sm:$0xff]
    %v1357 = vld [vmem:[%s179 + $0x10] sm:$0xff]
    %v1358 = vld [vmem:[%s179 + $0x18] sm:$0xff]
    %v1359 = vld [vmem:[%s184] sm:$0xff]
    %v1360 = vld [vmem:[%s184 + $0x8] sm:$0xff]
    %v1361 = vld [vmem:[%s184 + $0x10] sm:$0xff]
    %v1362 = vld [vmem:[%s184 + $0x18] sm:$0xff]
    %v1363 = vsel %vm113, %v1287, 0
    %1365 = vmatpush.msra.mxu0 0.0
    %1366 = vmatpush.msra.mxu0 0.0
    %1367 = vmatpush.msra.mxu0 0.0
    %1368 = vmatpush.msra.mxu0 0.0
    %1369 = vmatpush.msra.mxu0 0.0
    %1370 = vmatpush.msra.mxu0 0.0
    %1371 = vmatpush.msra.mxu0 0.0
    %1372 = vmatpush.msra.mxu0 0.0
    %1373 = vmatpush.msra.mxu0 0.0
    %1374 = vmatpush.msra.mxu0 0.0
    %1375 = vmatpush.msra.mxu0 0.0
    %1376 = vmatpush.msra.mxu0 0.0
    %1377 = vmatpush.msra.mxu0 %v1362
    %1378 = vmatpush.msra.mxu0 %v1361
    %1379 = vmatpush.msra.mxu0 %v1360
    %1380 = vmatpush.msra.mxu0 %v1359
    %1381 = vmatmul.f32.gmra.mxu0 %v1363
    %v1382 = vpop.f32.mrf.mxu0
    %v1383 = vadd.f32 0.0, %v1382
    %1384 = vdwg.mxu0
    %1386 = vrot.lane.b32.xlu0 %v1354, 64
    %v1387 = vpop.permute.xlu0 %1386
    %v1388 = vsel %vm113, %v1387, 0
    %1390 = vmatpush.msra.mxu0 0.0
    %1391 = vmatpush.msra.mxu0 0.0
    %1392 = vmatpush.msra.mxu0 0.0
    %1393 = vmatpush.msra.mxu0 0.0
    %1394 = vmatpush.msra.mxu0 0.0
    %1395 = vmatpush.msra.mxu0 0.0
    %1396 = vmatpush.msra.mxu0 0.0
    %1397 = vmatpush.msra.mxu0 0.0
    %1398 = vmatpush.msra.mxu0 0.0
    %1399 = vmatpush.msra.mxu0 0.0
    %1400 = vmatpush.msra.mxu0 0.0
    %1401 = vmatpush.msra.mxu0 0.0
    %1402 = vmatpush.msra.mxu0 %v1358
    %1403 = vmatpush.msra.mxu0 %v1357
    %1404 = vmatpush.msra.mxu0 %v1356
    %1405 = vmatpush.msra.mxu0 %v1355
    %1406 = vmatmul.f32.gmra.mxu0 %v1388
    %v1407 = vpop.f32.mrf.mxu0
    %v1408 = vadd.f32 %v1383, %v1407
    %1409 = vdwg.mxu0
    %v1410 = vld [vmem:[%s237] sm:$0x1]
    %v1412 = vperm.slane %v1410, 0
    %v1414 = vadd.f32 %v1408, %v1412
    %v1415 = vxor.u32 %v1414, 2147483648
    %v1416 = vmul.f32 %v1415, 1.442695
    %v1417 = vpow.pop %v1416
    %v1418 = vadd.f32 %v1417, 1.0
    %v1419 = vrcp.pop %v1418
    %v1420 = vmul.f32 %v1418, %v1419
    %v1421 = vsub.f32 1.0, %v1420
    %v1422 = vmul.f32 %v1419, %v1421
    %v1423 = vadd.f32 %v1419, %v1422
    %vm1424 = vweird.f32 %v1418
    %vm1425 = vweird.f32 %v1419
    %vm1426 = vmor %vm1424, %vm1425
    %v1427 = vsel %vm1426, %v1419, %v1423
    %v1428 = vand.u32 2147483647, %v1418
    %vm1429 = vcmp.eq.f32.partialorder %v1428, 8.507059e+37
    %v1430 = vand.u32 %v1418, 2147483648
    %v1431 = vor.u32 1.1754944e-38, %v1430
    %v1432 = vsel %vm1429, %v1431, %v1427
    %v1433 = vmul.f32 1.0, %v1432
    %v1434 = vtanh.pop %v1414
    %v1435 = vmul.f32 %v1433, %v1278
    %1437 = vrot.lane.b32.xlu0 %v1434, 32
    %v1438 = vpop.permute.xlu0 %1437
    %v1440 = vmul.f32 %v1433, %v1438
    %1442 = vrot.lane.b32.xlu0 %v1440, 32
    %v1443 = vpop.permute.xlu0 %1442
    %v1445 = vadd.f32 %v1435, %v1443
    %v1446 = vtanh.pop %v1445
    %1448 = vrot.lane.b32.xlu0 %v1446, 32
    %v1449 = vpop.permute.xlu0 %1448
    %v1451 = vmul.f32 %v1433, %v1449
    %1453 = vrot.lane.b32.xlu0 %v1451, 64
    %v1454 = vpop.permute.xlu0 %1453
    %s1456 = scalar_lea.vmem [#allocation11], 56
    %1457 = vst.msk [vmem:[%s1456] sm:$0xff] %vm113, %v1454
    // Predicated region
    $region46: #{tpu_custom_call.1} parent=1 // pred_check
      _
    $region47: #{tpu_custom_call.1} parent=1 // pred_check_branch
      %1459 = sbr.rel (0) target = $region49
    $region48: #{tpu_custom_call.1} parent=1 // pred_region
      %1461 = vsyncadd [#allocation4], 0
      %s1462 = sshll.u32 [#allocation11], 4
      %s1463 = int_to_ptr.vmem [resolvable:$true] %s1462
      %s1464 = sshll.u32 %s6, 4
      %s1465 = int_to_ptr.hbm [resolvable:$true] %s1464
      %1470 = dma.vmem_to_hbm [thread:$0]  %s1463, 1024, %s1465, [#allocation4], 128, 128, 8
    $region49: #{tpu_custom_call.1} parent=1 // pred_fallthru
      _
    // Predicated region
    $region50: #{tpu_custom_call.1} parent=1 // pred_check
      _
    $region51: #{tpu_custom_call.1} parent=1 // pred_check_branch
      %1472 = sbr.rel (0) target = $region53
    $region52: #{tpu_custom_call.1} parent=1 // pred_region
      %1474 = dma.done [#allocation4], 1024
    $region53: #{tpu_custom_call.1} parent=1 // pred_fallthru
      _
    %1475 = vsyncpa [#allocation3], 1
    %1476 = vsyncpa [#allocation6], 1
    %1477 = vsyncpa [#allocation9], 1
    %1478 = vsyncpa [#allocation4], 1

</llo_original>
